<compile_context>
chip_gen: v7x
topology: tpu7x:2x2x1
jax: 0.10.0
libtpu: 0.0.40
codegen_flags: <defaults>
</compile_context>

<pallas_src>
import functools

import jax
import jax.numpy as jnp
from jax.experimental import pallas as pl
from jax.experimental.pallas import tpu as pltpu

EPS = 1e-5


# ---------------------------------------------------------------------------
# Kernels
# ---------------------------------------------------------------------------
def _conv_s2_kernel(x_ref, w_ref, o_ref, stats_ref=None, *, post_relu=False):
    """4x4 stride-2 'same' conv on a phase-split, pre-padded input.

    x_ref    : (1, Ho+1, Wo+1, 4*Cin)  space-to-depth of zero-padded input
    w_ref    : (2, 2, 4*Cin, Cout)     weights packed per 2x2 spatial offset
    o_ref    : (1, Ho, Wo, Cout)       raw conv output (ReLU'd if post_relu)
    stats_ref: (1, 2, Cout)            per-image [sum, sumsq] over (H, W)
    """
    _, Ho, Wo, Cout = o_ref.shape
    x = x_ref[...].astype(jnp.float32)          # (1, Ho+1, Wo+1, 4*Cin)
    w = w_ref[...].astype(jnp.float32)          # (2, 2, 4*Cin, Cout)

    acc = jnp.zeros((1, Ho, Wo, Cout), jnp.float32)
    for a in range(2):
        for b in range(2):
            patch = x[:, a:a + Ho, b:b + Wo, :]            # (1, Ho, Wo, 4Cin)
            acc = acc + jax.lax.dot_general(
                patch, w[a, b],
                dimension_numbers=(((3,), (0,)), ((), ())),
                preferred_element_type=jnp.float32)

    if stats_ref is not None:
        s1 = jnp.sum(acc, axis=(0, 1, 2), keepdims=True)           # (1,1,1,C)
        s2 = jnp.sum(acc * acc, axis=(0, 1, 2), keepdims=True)
        stats_ref[0:1, 0:1, :] = s1[0]
        stats_ref[0:1, 1:2, :] = s2[0]

    y = jnp.maximum(acc, 0.0) if post_relu else acc
    o_ref[...] = y.astype(o_ref.dtype)


def _conv_s1_kernel(xp_ref, w_ref, o_ref):
    """4x4 stride-1 conv (pad already applied) — used for the final conv5."""
    _, Ho, Wo, Cout = o_ref.shape
    xp = xp_ref[...].astype(jnp.float32)        # (1, H+2, W+2, Cin)
    w = w_ref[...].astype(jnp.float32)          # (4, 4, Cin, Cout)
    acc = jnp.zeros((1, Ho, Wo, Cout), jnp.float32)
    for dy in range(4):
        for dx in range(4):
            patch = xp[:, dy:dy + Ho, dx:dx + Wo, :]
            acc = acc + jax.lax.dot_general(
                patch, w[dy, dx],
                dimension_numbers=(((3,), (0,)), ((), ())),
                preferred_element_type=jnp.float32)
    o_ref[...] = acc.astype(o_ref.dtype)


def _scale_shift_relu_kernel(x_ref, s_ref, t_ref, o_ref):
    """Lane-wise BN apply + ReLU: y = max(x*s + t, 0). s,t are (1,1,1,C)."""
    x = x_ref[...].astype(jnp.float32)
    y = jnp.maximum(x * s_ref[...] + t_ref[...], 0.0)
    o_ref[...] = y.astype(o_ref.dtype)


# ---------------------------------------------------------------------------
# Host-side helpers (cheap layout prep; heavy math stays in the kernels)
# ---------------------------------------------------------------------------
def _phase_split(x_nhwc):
    """Zero-pad by 1 and space-to-depth the 2x2 pixel phases onto lanes."""
    B, H, W, C = x_nhwc.shape
    Ho, Wo = H // 2, W // 2
    xp = jnp.pad(x_nhwc, ((0, 0), (1, 1), (1, 1), (0, 0)))
    xp = xp.reshape(B, Ho + 1, 2, Wo + 1, 2, C)
    xp = jnp.transpose(xp, (0, 1, 3, 2, 4, 5))
    return xp.reshape(B, Ho + 1, Wo + 1, 4 * C)


def _pack_w_s2(w_oihw):
    """(Cout,Cin,4,4) torch weights -> (2,2,4*Cin,Cout) per-offset matmul weights."""
    Cout, Cin, _, _ = w_oihw.shape
    w = jnp.transpose(w_oihw, (2, 3, 1, 0))          # (kh, kw, Cin, Cout)
    w = w.reshape(2, 2, 2, 2, Cin, Cout)             # (a, py, b, px, Cin, Cout)
    w = jnp.transpose(w, (0, 2, 1, 3, 4, 5))         # (a, b, py, px, Cin, Cout)
    return w.reshape(2, 2, 4 * Cin, Cout)


def _conv_s2(x_nhwc, w_oihw, *, post_relu, emit_stats):
    B, H, W, Cin = x_nhwc.shape
    Cout = w_oihw.shape[0]
    Ho, Wo = H // 2, W // 2

    xph = _phase_split(x_nhwc)                       # (B, Ho+1, Wo+1, 4Cin)
    wp = _pack_w_s2(w_oihw)                          # (2, 2, 4Cin, Cout)

    kernel = functools.partial(_conv_s2_kernel, post_relu=post_relu)

    if emit_stats:
        out_shape = [jax.ShapeDtypeStruct((B, Ho, Wo, Cout), x_nhwc.dtype),
                     jax.ShapeDtypeStruct((B, 2, Cout), jnp.float32)]
        out_specs = [pl.BlockSpec((1, Ho, Wo, Cout), lambda b: (b, 0, 0, 0)),
                     pl.BlockSpec((1, 2, Cout), lambda b: (b, 0, 0))]
    else:
        out_shape = jax.ShapeDtypeStruct((B, Ho, Wo, Cout), x_nhwc.dtype)
        out_specs = pl.BlockSpec((1, Ho, Wo, Cout), lambda b: (b, 0, 0, 0))

    return pl.pallas_call(
        kernel,
        grid=(B,),
        in_specs=[
            pl.BlockSpec((1, Ho + 1, Wo + 1, 4 * Cin), lambda b: (b, 0, 0, 0)),
            pl.BlockSpec((2, 2, 4 * Cin, Cout), lambda b: (0, 0, 0, 0)),
        ],
        out_specs=out_specs,
        out_shape=out_shape,
        compiler_params=pltpu.CompilerParams(
            dimension_semantics=("parallel",)),
    )(xph, wp)


def _conv_s1(x_nhwc, w_oihw):
    B, H, W, Cin = x_nhwc.shape
    Cout = w_oihw.shape[0]
    Ho, Wo = H - 1, W - 1
    xp = jnp.pad(x_nhwc, ((0, 0), (1, 1), (1, 1), (0, 0)))
    w = jnp.transpose(w_oihw, (2, 3, 1, 0))          # (4, 4, Cin, Cout)
    return pl.pallas_call(
        _conv_s1_kernel,
        grid=(B,),
        in_specs=[
            pl.BlockSpec((1, H + 2, W + 2, Cin), lambda b: (b, 0, 0, 0)),
            pl.BlockSpec((4, 4, Cin, Cout), lambda b: (0, 0, 0, 0)),
        ],
        out_specs=pl.BlockSpec((1, Ho, Wo, Cout), lambda b: (b, 0, 0, 0)),
        out_shape=jax.ShapeDtypeStruct((B, Ho, Wo, Cout), x_nhwc.dtype),
        compiler_params=pltpu.CompilerParams(
            dimension_semantics=("parallel",)),
    )(xp, w)


def _bn_scale_shift(stats, gamma, beta, n):
    """Fold batch stats into per-channel scale/shift: y = x*s + t."""
    tot = jnp.sum(stats, axis=0)                     # (2, C)
    mean = tot[0] / n
    var = jnp.maximum(tot[1] / n - mean * mean, 0.0)  # biased variance
    inv = jax.lax.rsqrt(var + EPS)
    scale = gamma * inv
    shift = beta - mean * scale
    return scale, shift


def _bn_relu(x, scale, shift):
    B, H, W, C = x.shape
    return pl.pallas_call(
        _scale_shift_relu_kernel,
        grid=(B,),
        in_specs=[
            pl.BlockSpec((1, H, W, C), lambda b: (b, 0, 0, 0)),
            pl.BlockSpec((1, 1, 1, C), lambda b: (0, 0, 0, 0)),
            pl.BlockSpec((1, 1, 1, C), lambda b: (0, 0, 0, 0)),
        ],
        out_specs=pl.BlockSpec((1, H, W, C), lambda b: (b, 0, 0, 0)),
        out_shape=jax.ShapeDtypeStruct((B, H, W, C), x.dtype),
        compiler_params=pltpu.CompilerParams(
            dimension_semantics=("parallel",)),
    )(x, scale.reshape(1, 1, 1, C), shift.reshape(1, 1, 1, C))


# ---------------------------------------------------------------------------
# Public forward pass (NCHW in / NCHW out, matching PyTorch)
# ---------------------------------------------------------------------------
def discriminator_forward(x_nchw, params):
    x = jnp.transpose(x_nchw, (0, 2, 3, 1))          # NCHW -> NHWC

    # conv1: no BN, ReLU fused into the conv epilogue.
    h = _conv_s2(x, params["w1"], post_relu=True, emit_stats=False)

    # conv2..conv4: conv (raw) + per-image stats, then BN+ReLU apply kernel.
    for i in (2, 3, 4):
        h, st = _conv_s2(h, params[f"w{i}"], post_relu=False, emit_stats=True)
        B, Ho, Wo, _ = h.shape
        s, t = _bn_scale_shift(st, params[f"g{i}"], params[f"b{i}"], B * Ho * Wo)
        h = _bn_relu(h, s, t)

    # conv5: stride 1, no BN, no ReLU.
    out = _conv_s1(h, params["w5"])
    return jnp.transpose(out, (0, 3, 1, 2))          # NHWC -> NCHW


def init_params(key, conv_dim):
    """Deterministic synthetic params in PyTorch layout (Cout, Cin, kh, kw)."""
    ks = jax.random.split(key, 5)
    cd = conv_dim

    def w(k, cout, cin):
        return 0.1 * jax.random.normal(k, (cout, cin, 4, 4), jnp.float32)

    return {
        "w1": w(ks[0], cd, 3),
        "w2": w(ks[1], cd * 2, cd),
        "g2": jnp.ones((cd * 2,), jnp.float32),
        "b2": jnp.zeros((cd * 2,), jnp.float32),
        "w3": w(ks[2], cd * 4, cd * 2),
        "g3": jnp.ones((cd * 4,), jnp.float32),
        "b3": jnp.zeros((cd * 4,), jnp.float32),
        "w4": w(ks[3], cd * 8, cd * 4),
        "g4": jnp.ones((cd * 8,), jnp.float32),
        "b4": jnp.zeros((cd * 8,), jnp.float32),
        "w5": w(ks[4], 1, cd * 8),
    }


# ---------------------------------------------------------------------------
# Pure-JAX reference (for correctness check only)
# ---------------------------------------------------------------------------
def _reference_forward(x_nchw, params):
    x = jnp.transpose(x_nchw, (0, 2, 3, 1))

    def conv(x, w_oihw, stride):
        w = jnp.transpose(w_oihw, (2, 3, 1, 0))      # HWIO
        return jax.lax.conv_general_dilated(
            x, w, window_strides=(stride, stride), padding=((1, 1), (1, 1)),
            dimension_numbers=("NHWC", "HWIO", "NHWC"),
            precision=jax.lax.Precision.HIGHEST)

    def bn(x, g, b):
        mean = jnp.mean(x, axis=(0, 1, 2), keepdims=True)
        var = jnp.mean((x - mean) ** 2, axis=(0, 1, 2), keepdims=True)
        return (x - mean) * jax.lax.rsqrt(var + EPS) * g + b

    h = jax.nn.relu(conv(x, params["w1"], 2))
    h = jax.nn.relu(bn(conv(h, params["w2"], 2), params["g2"], params["b2"]))
    h = jax.nn.relu(bn(conv(h, params["w3"], 2), params["g3"], params["b3"]))
    h = jax.nn.relu(bn(conv(h, params["w4"], 2), params["g4"], params["b4"]))
    h = conv(h, params["w5"], 1)
    return jnp.transpose(h, (0, 3, 1, 2))


if __name__ == "__main__":
    key = jax.random.PRNGKey(0)
    k_x, k_p = jax.random.split(key)

    # Spatial 32 is the smallest size for which all 5 layers are valid
    # (conv5 needs >= 2x2 input).  conv_dim kept small (4) for the smoke test.
    B, C_in, H, W = 2, 3, 32, 32
    conv_dim = 4

    x = jax.random.normal(k_x, (B, C_in, H, W), jnp.float32)
    params = init_params(k_p, conv_dim)

    out = discriminator_forward(x, params)
    out = jax.block_until_ready(out)

    assert out.shape == (B, 1, 1, 1), out.shape
    assert bool(jnp.all(jnp.isfinite(out)))

    ref = _reference_forward(x, params)
    assert jnp.allclose(out, ref, rtol=5e-3, atol=5e-3), (out, ref)

    print("KERNEL_OK")
</pallas_src>

<mosaic_0001>
module attributes {stable_mosaic.version = 11 : i64} {
  func.func @_conv_s2_kernel(%arg0: i32, %arg1: memref<1x17x17x12xf32, #tpu.memory_space<vmem>>, %arg2: memref<2x2x12x4xf32, #tpu.memory_space<vmem>>, %arg3: memref<1x16x16x4xf32, #tpu.memory_space<vmem>>) attributes {dimension_semantics = [#tpu.dimension_semantics<parallel>], iteration_bounds = array<i64: 2>, scalar_prefetch = 0 : i64, scratch_operands = 0 : i64, tpu.core_type = #tpu.core_type<tc>, window_params = [{transform_indices = @transform_0, window_bounds = array<i64: 1, 17, 17, 12>}, {pipeline_mode = #tpu.pipeline_mode<synchronous>, transform_indices = @transform_1, window_bounds = array<i64: 2, 2, 12, 4>}, {transform_indices = @transform_2, window_bounds = array<i64: 1, 16, 16, 4>}]} {
    %c0 = arith.constant 0 : index
    %c0_0 = arith.constant 0 : index
    %c0_1 = arith.constant 0 : index
    %c0_2 = arith.constant 0 : index
    %0 = vector.load %arg1[%c0, %c0_0, %c0_1, %c0_2] : memref<1x17x17x12xf32, #tpu.memory_space<vmem>>, vector<1x17x17x12xf32>
    %c0_3 = arith.constant 0 : index
    %c0_4 = arith.constant 0 : index
    %c0_5 = arith.constant 0 : index
    %c0_6 = arith.constant 0 : index
    %1 = vector.load %arg2[%c0_3, %c0_4, %c0_5, %c0_6] : memref<2x2x12x4xf32, #tpu.memory_space<vmem>>, vector<2x2x12x4xf32>
    %cst = arith.constant 0.000000e+00 : f32
    %2 = vector.broadcast %cst : f32 to vector<1x16x16x4xf32>
    %3 = vector.extract_strided_slice %0 {offsets = [0, 0, 0, 0], sizes = [1, 16, 16, 12], strides = [1, 1, 1, 1]} : vector<1x17x17x12xf32> to vector<1x16x16x12xf32>
    %4 = vector.extract_strided_slice %1 {offsets = [0, 0, 0, 0], sizes = [1, 1, 12, 4], strides = [1, 1, 1, 1]} : vector<2x2x12x4xf32> to vector<1x1x12x4xf32>
    %5 = vector.shape_cast %4 : vector<1x1x12x4xf32> to vector<12x4xf32>
    %cst_7 = arith.constant dense<0.000000e+00> : vector<1x16x16x4xf32>
    %6 = tpu.matmul %3, %5, %cst_7 {dimension_numbers = #tpu.dot_dimension_numbers<[3], [0], [0, 1, 2], [1], [0, 0, 0, 1, 0, 2, 1, 1], [], []>} : vector<1x16x16x12xf32>, vector<12x4xf32>, vector<1x16x16x4xf32> -> vector<1x16x16x4xf32>
    %7 = arith.addf %2, %6 : vector<1x16x16x4xf32>
    %8 = vector.extract_strided_slice %0 {offsets = [0, 0, 1, 0], sizes = [1, 16, 16, 12], strides = [1, 1, 1, 1]} : vector<1x17x17x12xf32> to vector<1x16x16x12xf32>
    %9 = vector.extract_strided_slice %1 {offsets = [0, 1, 0, 0], sizes = [1, 1, 12, 4], strides = [1, 1, 1, 1]} : vector<2x2x12x4xf32> to vector<1x1x12x4xf32>
    %10 = vector.shape_cast %9 : vector<1x1x12x4xf32> to vector<12x4xf32>
    %cst_8 = arith.constant dense<0.000000e+00> : vector<1x16x16x4xf32>
    %11 = tpu.matmul %8, %10, %cst_8 {dimension_numbers = #tpu.dot_dimension_numbers<[3], [0], [0, 1, 2], [1], [0, 0, 0, 1, 0, 2, 1, 1], [], []>} : vector<1x16x16x12xf32>, vector<12x4xf32>, vector<1x16x16x4xf32> -> vector<1x16x16x4xf32>
    %12 = arith.addf %7, %11 : vector<1x16x16x4xf32>
    %13 = vector.extract_strided_slice %0 {offsets = [0, 1, 0, 0], sizes = [1, 16, 16, 12], strides = [1, 1, 1, 1]} : vector<1x17x17x12xf32> to vector<1x16x16x12xf32>
    %14 = vector.extract_strided_slice %1 {offsets = [1, 0, 0, 0], sizes = [1, 1, 12, 4], strides = [1, 1, 1, 1]} : vector<2x2x12x4xf32> to vector<1x1x12x4xf32>
    %15 = vector.shape_cast %14 : vector<1x1x12x4xf32> to vector<12x4xf32>
    %cst_9 = arith.constant dense<0.000000e+00> : vector<1x16x16x4xf32>
    %16 = tpu.matmul %13, %15, %cst_9 {dimension_numbers = #tpu.dot_dimension_numbers<[3], [0], [0, 1, 2], [1], [0, 0, 0, 1, 0, 2, 1, 1], [], []>} : vector<1x16x16x12xf32>, vector<12x4xf32>, vector<1x16x16x4xf32> -> vector<1x16x16x4xf32>
    %17 = arith.addf %12, %16 : vector<1x16x16x4xf32>
    %18 = vector.extract_strided_slice %0 {offsets = [0, 1, 1, 0], sizes = [1, 16, 16, 12], strides = [1, 1, 1, 1]} : vector<1x17x17x12xf32> to vector<1x16x16x12xf32>
    %19 = vector.extract_strided_slice %1 {offsets = [1, 1, 0, 0], sizes = [1, 1, 12, 4], strides = [1, 1, 1, 1]} : vector<2x2x12x4xf32> to vector<1x1x12x4xf32>
    %20 = vector.shape_cast %19 : vector<1x1x12x4xf32> to vector<12x4xf32>
    %cst_10 = arith.constant dense<0.000000e+00> : vector<1x16x16x4xf32>
    %21 = tpu.matmul %18, %20, %cst_10 {dimension_numbers = #tpu.dot_dimension_numbers<[3], [0], [0, 1, 2], [1], [0, 0, 0, 1, 0, 2, 1, 1], [], []>} : vector<1x16x16x12xf32>, vector<12x4xf32>, vector<1x16x16x4xf32> -> vector<1x16x16x4xf32>
    %22 = arith.addf %17, %21 : vector<1x16x16x4xf32>
    %cst_11 = arith.constant 0.000000e+00 : f32
    %23 = vector.broadcast %cst_11 : f32 to vector<1x16x16x4xf32>
    %24 = arith.maximumf %22, %23 : vector<1x16x16x4xf32>
    %c0_12 = arith.constant 0 : index
    %c0_13 = arith.constant 0 : index
    %c0_14 = arith.constant 0 : index
    %c0_15 = arith.constant 0 : index
    %25 = vector.load %arg3[%c0_12, %c0_13, %c0_14, %c0_15] : memref<1x16x16x4xf32, #tpu.memory_space<vmem>>, vector<1x16x16x4xf32>
    tpu.vector_store %arg3[%c0_12, %c0_13, %c0_14, %c0_15], %24 {strides = array<i32>} : memref<1x16x16x4xf32, #tpu.memory_space<vmem>>, vector<1x16x16x4xf32>,
    return
  }
  func.func @transform_0(%arg0: i32) -> (i32, i32, i32, i32) {
    %c0_i32 = arith.constant 0 : i32
    %c0_i32_0 = arith.constant 0 : i32
    %c0_i32_1 = arith.constant 0 : i32
    %c0_i32_2 = arith.constant 0 : i32
    return %arg0, %c0_i32, %c0_i32_0, %c0_i32_1 : i32, i32, i32, i32
  }
  func.func @transform_1(%arg0: i32) -> (i32, i32, i32, i32) {
    %c0_i32 = arith.constant 0 : i32
    %c0_i32_0 = arith.constant 0 : i32
    %c0_i32_1 = arith.constant 0 : i32
    %c0_i32_2 = arith.constant 0 : i32
    %c0_i32_3 = arith.constant 0 : i32
    return %c0_i32, %c0_i32_0, %c0_i32_1, %c0_i32_2 : i32, i32, i32, i32
  }
  func.func @transform_2(%arg0: i32) -> (i32, i32, i32, i32) {
    %c0_i32 = arith.constant 0 : i32
    %c0_i32_0 = arith.constant 0 : i32
    %c0_i32_1 = arith.constant 0 : i32
    %c0_i32_2 = arith.constant 0 : i32
    return %arg0, %c0_i32, %c0_i32_0, %c0_i32_1 : i32, i32, i32, i32
  }
}

</mosaic_0001>

<llo_original>
// kernel: tpu_custom_call.1
$region0: #{tpu_custom_call.1}
  #allocation0 [shape = 'u32[]', space=smem, size = 0x4, offset = 0x4, fixed_abs, tag = 'smem constant byte address 0x4 - core index']
  #allocation1 [shape = 'u32[144,128]{1,0:T(1,128)}', space=vmem, size = 0x12000, scoped, tag = 'internal scratch']
  %s0 = inlined_call_operand.vmem [shape: f32[2,17,17,12], index: 0, kind: input, shape index: {}]
  %s1 = inlined_call_operand.vmem [shape: f32[2,2,12,4], index: 1, kind: input, shape index: {}]
  %s2 = inlined_call_operand.vmem [shape: f32[2,16,16,4], index: 2, kind: output, shape index: {}]
  %s3 = sld [smem:[#allocation0]]
  $region41: #{tpu_custom_call.1} parent=0
    _
  %s5 = ssub.s32 1, %s3
  %s6 = scalar_select 0, %s5, %s3
  loop: start=0, step=1, limit=4
  $region2: #{tpu_custom_call.1} parent=0 // loop_pre_header
    _
  $region3: #{tpu_custom_call.1} parent=0 // loop_header
    %s8 = sphi 0, %s12
    %p9 = scmp.ge.s32.totalorder %s8, 4
    %s18 = sphi 0, %s20
    %s21 = sphi 0, %s18
    %s22 = sphi 0, %s21
    %s38 = sphi 0, %s22
    %s42 = sphi 0, %s42
    %s44 = sphi 0, %s42
    %s45 = sphi 0, %s44
    %s59 = sphi 0, %s45
    %s65 = sphi 0, %s67
    %s68 = sphi 0, %s65
    %s69 = sphi 0, %s68
    %s85 = sphi 0, %s69
  $region4: #{tpu_custom_call.1} parent=0 // loop_header_branch
    %11 = sbr.rel (%p9) target = $region8
  $region5: #{tpu_custom_call.1} parent=0 // loop_body
    %s13 = ssub.s32 %s8, 1
    %s14 = ssub.s32 %s8, 2
    %s15 = sadd.s32 %s8, 1
    %s16 = ssub.s32 %s8, %s15
    %p17 = scmp.eq.s32.totalorder %s16, 0
    %s19 = sadd.s32 %s18, 1
    %s20 = scalar_select %p17, %s18, %s19
    %p23 = pneg %p17
    %p24 = scmp.eq.s32.totalorder %s8, 1
    %p25 = por %p23, %p24
    %p26 = scmp.ne.s32.totalorder %s18, %s21
    %p27 = scmp.eq.s32.totalorder %s8, 0
    %p28 = por %p26, %p27
    %p29 = scmp.ne.s32.totalorder %s18, %s21
    %p30 = scmp.eq.s32.totalorder %s13, 1
    %p31 = por %p29, %p30
    %p32 = scmp.ne.s32.totalorder %s21, %s22
    %p33 = scmp.eq.s32.totalorder %s13, 0
    %p34 = por %p32, %p33
    %p35 = scmp.ne.s32.totalorder %s21, %s22
    %p36 = scmp.eq.s32.totalorder %s14, 1
    %p37 = por %p35, %p36
    %p39 = scmp.ne.s32.totalorder %s22, %s38
    %p40 = scmp.eq.s32.totalorder %s14, 0
    %p41 = por %p39, %p40
    %s43 = sadd.s32 %s42, 1
    %p46 = scmp.eq.s32.totalorder %s8, 1
    %p47 = scmp.ne.s32.totalorder %s42, %s44
    %p48 = scmp.eq.s32.totalorder %s8, 0
    %p49 = por %p47, %p48
    %p50 = scmp.ne.s32.totalorder %s42, %s44
    %p51 = scmp.eq.s32.totalorder %s13, 1
    %p52 = por %p50, %p51
    %p53 = scmp.ne.s32.totalorder %s44, %s45
    %p54 = scmp.eq.s32.totalorder %s13, 0
    %p55 = por %p53, %p54
    %p56 = scmp.ne.s32.totalorder %s44, %s45
    %p57 = scmp.eq.s32.totalorder %s14, 1
    %p58 = por %p56, %p57
    %p60 = scmp.ne.s32.totalorder %s45, %s59
    %p61 = scmp.eq.s32.totalorder %s14, 0
    %p62 = por %p60, %p61
    %s63 = ssub.s32 %s8, %s15
    %p64 = scmp.eq.s32.totalorder %s63, 0
    %s66 = sadd.s32 %s65, 1
    %s67 = scalar_select %p64, %s65, %s66
    %p70 = pneg %p64
    %p71 = scmp.eq.s32.totalorder %s8, 1
    %p72 = por %p70, %p71
    %p73 = scmp.ne.s32.totalorder %s65, %s68
    %p74 = scmp.eq.s32.totalorder %s8, 0
    %p75 = por %p73, %p74
    %p76 = scmp.ne.s32.totalorder %s65, %s68
    %p77 = scmp.eq.s32.totalorder %s13, 1
    %p78 = por %p76, %p77
    %p79 = scmp.ne.s32.totalorder %s68, %s69
    %p80 = scmp.eq.s32.totalorder %s13, 0
    %p81 = por %p79, %p80
    %p82 = scmp.ne.s32.totalorder %s68, %s69
    %p83 = scmp.eq.s32.totalorder %s14, 1
    %p84 = por %p82, %p83
    %p86 = scmp.ne.s32.totalorder %s69, %s85
    %p87 = scmp.eq.s32.totalorder %s14, 0
    %p88 = por %p86, %p87
    %p89 = scmp.le.s32.totalorder 1, %s8
    %p90 = scmp.lt.s32.totalorder %s8, 3
    %p91 = pnand %p89, %p90
    %p92 = pneg %p91
    // Predicated region
    $region9: #{tpu_custom_call.1} parent=5 // pred_check
      _
    $region10: #{tpu_custom_call.1} parent=5 // pred_check_branch
      %94 = sbr.rel (%p91) target = $region12
    $region11: #{tpu_custom_call.1} parent=5 // pred_region
      %s95 = ssub.s32 %s8, 1
      // Predicated region
      $region13: #{tpu_custom_call.1} parent=11 // pred_check
        %p96 = pneg %p55
      $region14: #{tpu_custom_call.1} parent=11 // pred_check_branch
        %98 = sbr.rel (%p96) target = $region16
      $region15: #{tpu_custom_call.1} parent=11 // pred_region
        _
      $region16: #{tpu_custom_call.1} parent=11 // pred_fallthru
        _
    $region12: #{tpu_custom_call.1} parent=5 // pred_fallthru
      _
    %p99 = scmp.lt.s32.totalorder %s8, 2
    // Predicated region
    $region17: #{tpu_custom_call.1} parent=5 // pred_check
      %p100 = pneg %p99
    $region18: #{tpu_custom_call.1} parent=5 // pred_check_branch
      %102 = sbr.rel (%p100) target = $region20
    $region19: #{tpu_custom_call.1} parent=5 // pred_region
      // Predicated region
      $region21: #{tpu_custom_call.1} parent=19 // pred_check
        %p103 = pneg %p28
      $region22: #{tpu_custom_call.1} parent=19 // pred_check_branch
        %105 = sbr.rel (%p103) target = $region24
      $region23: #{tpu_custom_call.1} parent=19 // pred_region
        %p106 = scmp.lt.s32.totalorder %s8, 1
        %s107 = scalar_select %p106, %s8, 1
        %s108 = smul.addr %s107, 51
        %s109 = smul.addr %s108, 8
        %s110 = scalar_lea.vmem %s0, %s109
      $region24: #{tpu_custom_call.1} parent=19 // pred_fallthru
        _
    $region20: #{tpu_custom_call.1} parent=5 // pred_fallthru
      _
    %p111 = scmp.le.s32.totalorder 1, %s8
    %p112 = scmp.lt.s32.totalorder %s8, 3
    %p113 = pnand %p111, %p112
    %p114 = pneg %p113
    // Predicated region
    $region25: #{tpu_custom_call.1} parent=5 // pred_check
      _
    $region26: #{tpu_custom_call.1} parent=5 // pred_check_branch
      %116 = sbr.rel (%p113) target = $region28
    $region27: #{tpu_custom_call.1} parent=5 // pred_region
      %s117 = ssub.s32 %s8, 1
      %p118 = scmp.lt.s32.totalorder %s13, 1
      %s119 = scalar_select %p118, %s13, 1
      %s120 = smul.addr %s119, 51
      %s121 = smul.addr %s120, 8
      %s122 = scalar_lea.vmem %s0, %s121
      %p123 = pneg %p34
      %p124 = pneg %p31
      %p125 = pneg %p55
      %p126 = pneg %p52
      %p127 = pneg %p81
      %p128 = pneg %p78
      %p129 = scmp.lt.s32.totalorder %s13, 1
      %s130 = scalar_select %p129, %s13, 1
      %s131 = smul.addr %s130, 32
      %s132 = smul.addr %s131, 8
      %s133 = scalar_lea.vmem %s2, %s132
      %p134 = scmp.lt.s32.totalorder %s13, 1
      %s135 = scalar_select %p134, %s13, 1
      %s136 = smul.addr %s135, 51
      %s137 = smul.addr %s136, 8
      %s138 = scalar_lea.vmem %s0, %s137
      %p139 = scmp.lt.s32.totalorder %s13, 1
      %s140 = scalar_select %p139, %s13, 1
      %s141 = smul.addr %s140, 32
      %s142 = smul.addr %s141, 8
      %s143 = scalar_lea.vmem %s2, %s142
      %v144 = vld [vmem:[%s138] sm:$0xff]
      %v145 = vld [vmem:[%s138 + $0x8] sm:$0xff]
      %v146 = vld [vmem:[%s138 + $0x10] sm:$0x1]
      %v147 = vld [vmem:[%s138 + $0x18] sm:$0xff]
      %v148 = vld [vmem:[%s138 + $0x20] sm:$0xff]
      %v149 = vld [vmem:[%s138 + $0x28] sm:$0x1]
      %v150 = vld [vmem:[%s138 + $0x30] sm:$0xff]
      %v151 = vld [vmem:[%s138 + $0x38] sm:$0xff]
      %v152 = vld [vmem:[%s138 + $0x40] sm:$0x1]
      %v153 = vld [vmem:[%s138 + $0x48] sm:$0xff]
      %v154 = vld [vmem:[%s138 + $0x50] sm:$0xff]
      %v155 = vld [vmem:[%s138 + $0x58] sm:$0x1]
      %v156 = vld [vmem:[%s138 + $0x60] sm:$0xff]
      %v157 = vld [vmem:[%s138 + $0x68] sm:$0xff]
      %v158 = vld [vmem:[%s138 + $0x70] sm:$0x1]
      %v159 = vld [vmem:[%s138 + $0x78] sm:$0xff]
      %v160 = vld [vmem:[%s138 + $0x80] sm:$0xff]
      %v161 = vld [vmem:[%s138 + $0x88] sm:$0x1]
      %v162 = vld [vmem:[%s138 + $0x90] sm:$0xff]
      %v163 = vld [vmem:[%s138 + $0x98] sm:$0xff]
      %v164 = vld [vmem:[%s138 + $0xa0] sm:$0x1]
      %v165 = vld [vmem:[%s138 + $0xa8] sm:$0xff]
      %v166 = vld [vmem:[%s138 + $0xb0] sm:$0xff]
      %v167 = vld [vmem:[%s138 + $0xb8] sm:$0x1]
      %v168 = vld [vmem:[%s138 + $0xc0] sm:$0xff]
      %v169 = vld [vmem:[%s138 + $0xc8] sm:$0xff]
      %v170 = vld [vmem:[%s138 + $0xd0] sm:$0x1]
      %v171 = vld [vmem:[%s138 + $0xd8] sm:$0xff]
      %v172 = vld [vmem:[%s138 + $0xe0] sm:$0xff]
      %v173 = vld [vmem:[%s138 + $0xe8] sm:$0x1]
      %v174 = vld [vmem:[%s138 + $0xf0] sm:$0xff]
      %v175 = vld [vmem:[%s138 + $0xf8] sm:$0xff]
      %v176 = vld [vmem:[%s138 + $0x100] sm:$0x1]
      %v177 = vld [vmem:[%s138 + $0x108] sm:$0xff]
      %v178 = vld [vmem:[%s138 + $0x110] sm:$0xff]
      %v179 = vld [vmem:[%s138 + $0x118] sm:$0x1]
      %v180 = vld [vmem:[%s138 + $0x120] sm:$0xff]
      %v181 = vld [vmem:[%s138 + $0x128] sm:$0xff]
      %v182 = vld [vmem:[%s138 + $0x130] sm:$0x1]
      %v183 = vld [vmem:[%s138 + $0x138] sm:$0xff]
      %v184 = vld [vmem:[%s138 + $0x140] sm:$0xff]
      %v185 = vld [vmem:[%s138 + $0x148] sm:$0x1]
      %v186 = vld [vmem:[%s138 + $0x150] sm:$0xff]
      %v187 = vld [vmem:[%s138 + $0x158] sm:$0xff]
      %v188 = vld [vmem:[%s138 + $0x160] sm:$0x1]
      %v189 = vld [vmem:[%s138 + $0x168] sm:$0xff]
      %v190 = vld [vmem:[%s138 + $0x170] sm:$0xff]
      %v191 = vld [vmem:[%s138 + $0x178] sm:$0x1]
      %v192 = vld [vmem:[%s138 + $0x180] sm:$0xff]
      %v193 = vld [vmem:[%s138 + $0x188] sm:$0xff]
      %v194 = vld [vmem:[%s138 + $0x190] sm:$0x1]
      %v195 = vld [vmem:[%s1] sm:$0xff]
      %v196 = vld [vmem:[%s1 + $0x8] sm:$0xf]
      %v197 = vld [vmem:[%s1 + $0x10] sm:$0xff]
      %v198 = vld [vmem:[%s1 + $0x18] sm:$0xf]
      %v199 = vld [vmem:[%s1 + $0x20] sm:$0xff]
      %v200 = vld [vmem:[%s1 + $0x28] sm:$0xf]
      %v201 = vld [vmem:[%s1 + $0x30] sm:$0xff]
      %v202 = vld [vmem:[%s1 + $0x38] sm:$0xf]
      %vm251 = vcmask 1046528
      %v252 = vrot.slane %v144, 1
      %v253 = vrot.slane %v145, 1
      %v254 = vsel %vm251, %v252, %v253
      %v255 = vrot.slane %v146, 1
      %v256 = vsel %vm251, %v253, %v255
      %v257 = vrot.slane %v147, 1
      %v258 = vrot.slane %v148, 1
      %v259 = vsel %vm251, %v257, %v258
      %v260 = vrot.slane %v149, 1
      %v261 = vsel %vm251, %v258, %v260
      %v262 = vrot.slane %v150, 1
      %v263 = vrot.slane %v151, 1
      %v264 = vsel %vm251, %v262, %v263
      %v265 = vrot.slane %v152, 1
      %v266 = vsel %vm251, %v263, %v265
      %v267 = vrot.slane %v153, 1
      %v268 = vrot.slane %v154, 1
      %v269 = vsel %vm251, %v267, %v268
      %v270 = vrot.slane %v155, 1
      %v271 = vsel %vm251, %v268, %v270
      %v272 = vrot.slane %v156, 1
      %v273 = vrot.slane %v157, 1
      %v274 = vsel %vm251, %v272, %v273
      %v275 = vrot.slane %v158, 1
      %v276 = vsel %vm251, %v273, %v275
      %v277 = vrot.slane %v159, 1
      %v278 = vrot.slane %v160, 1
      %v279 = vsel %vm251, %v277, %v278
      %v280 = vrot.slane %v161, 1
      %v281 = vsel %vm251, %v278, %v280
      %v282 = vrot.slane %v162, 1
      %v283 = vrot.slane %v163, 1
      %v284 = vsel %vm251, %v282, %v283
      %v285 = vrot.slane %v164, 1
      %v286 = vsel %vm251, %v283, %v285
      %v287 = vrot.slane %v165, 1
      %v288 = vrot.slane %v166, 1
      %v289 = vsel %vm251, %v287, %v288
      %v290 = vrot.slane %v167, 1
      %v291 = vsel %vm251, %v288, %v290
      %v292 = vrot.slane %v168, 1
      %v293 = vrot.slane %v169, 1
      %v294 = vsel %vm251, %v292, %v293
      %v295 = vrot.slane %v170, 1
      %v296 = vsel %vm251, %v293, %v295
      %v297 = vrot.slane %v171, 1
      %v298 = vrot.slane %v172, 1
      %v299 = vsel %vm251, %v297, %v298
      %v300 = vrot.slane %v173, 1
      %v301 = vsel %vm251, %v298, %v300
      %v302 = vrot.slane %v174, 1
      %v303 = vrot.slane %v175, 1
      %v304 = vsel %vm251, %v302, %v303
      %v305 = vrot.slane %v176, 1
      %v306 = vsel %vm251, %v303, %v305
      %v307 = vrot.slane %v177, 1
      %v308 = vrot.slane %v178, 1
      %v309 = vsel %vm251, %v307, %v308
      %v310 = vrot.slane %v179, 1
      %v311 = vsel %vm251, %v308, %v310
      %v312 = vrot.slane %v180, 1
      %v313 = vrot.slane %v181, 1
      %v314 = vsel %vm251, %v312, %v313
      %v315 = vrot.slane %v182, 1
      %v316 = vsel %vm251, %v313, %v315
      %v317 = vrot.slane %v183, 1
      %v318 = vrot.slane %v184, 1
      %v319 = vsel %vm251, %v317, %v318
      %v320 = vrot.slane %v185, 1
      %v321 = vsel %vm251, %v318, %v320
      %v322 = vrot.slane %v186, 1
      %v323 = vrot.slane %v187, 1
      %v324 = vsel %vm251, %v322, %v323
      %v325 = vrot.slane %v188, 1
      %v326 = vsel %vm251, %v323, %v325
      %v327 = vrot.slane %v189, 1
      %v328 = vrot.slane %v190, 1
      %v329 = vsel %vm251, %v327, %v328
      %v330 = vrot.slane %v191, 1
      %v331 = vsel %vm251, %v328, %v330
      %vm332 = vcmask 97280
      %v333 = vsel %vm332, %v254, 0
      %v335 = vsel %vm332, %v256, 0
      %v337 = vsel %vm332, %v259, 0
      %v339 = vsel %vm332, %v261, 0
      %v341 = vsel %vm332, %v264, 0
      %v343 = vsel %vm332, %v266, 0
      %v345 = vsel %vm332, %v269, 0
      %v347 = vsel %vm332, %v271, 0
      %v349 = vsel %vm332, %v274, 0
      %v351 = vsel %vm332, %v276, 0
      %v353 = vsel %vm332, %v279, 0
      %v355 = vsel %vm332, %v281, 0
      %v357 = vsel %vm332, %v284, 0
      %v359 = vsel %vm332, %v286, 0
      %v361 = vsel %vm332, %v289, 0
      %v363 = vsel %vm332, %v291, 0
      %v365 = vsel %vm332, %v294, 0
      %v367 = vsel %vm332, %v296, 0
      %v369 = vsel %vm332, %v299, 0
      %v371 = vsel %vm332, %v301, 0
      %v373 = vsel %vm332, %v304, 0
      %v375 = vsel %vm332, %v306, 0
      %v377 = vsel %vm332, %v309, 0
      %v379 = vsel %vm332, %v311, 0
      %v381 = vsel %vm332, %v314, 0
      %v383 = vsel %vm332, %v316, 0
      %v385 = vsel %vm332, %v319, 0
      %v387 = vsel %vm332, %v321, 0
      %v389 = vsel %vm332, %v324, 0
      %v391 = vsel %vm332, %v326, 0
      %v393 = vsel %vm332, %v329, 0
      %v395 = vsel %vm332, %v331, 0
      %vm397 = vcmask 1043456
      %v399 = vsel %vm397, %v198, 0
      %401 = vmatprep.subr.mxu0 0.0
      %402 = vmatpush1.msra.mxu0 %v197
      %403 = vmatprep.subr.mxu0 0.0
      %404 = vmatpush1.msra.mxu0 %v399
      %405 = vmatprep.subr.mxu0 0.0
      %406 = vmatpush1.msra.mxu0 0.0
      %407 = vmatprep.subr.mxu0 0.0
      %408 = vmatpush1.msra.mxu0 0.0
      %409 = vmatprep.subr.mxu0 0.0
      %410 = vmatpush1.msra.mxu0 0.0
      %411 = vmatprep.subr.mxu0 0.0
      %412 = vmatpush1.msra.mxu0 0.0
      %413 = vmatprep.subr.mxu0 0.0
      %414 = vmatpush1.msra.mxu0 0.0
      %415 = vmatprep.subr.mxu0 0.0
      %416 = vmatpush1.msra.mxu0 0.0
      %417 = vmatprep.subr.mxu0 0.0
      %418 = vmatpush1.msra.mxu0 0.0
      %419 = vmatprep.subr.mxu0 0.0
      %420 = vmatpush1.msra.mxu0 0.0
      %421 = vmatprep.subr.mxu0 0.0
      %422 = vmatpush1.msra.mxu0 0.0
      %423 = vmatprep.subr.mxu0 0.0
      %424 = vmatpush1.msra.mxu0 0.0
      %425 = vmatprep.subr.mxu0 0.0
      %426 = vmatpush1.msra.mxu0 0.0
      %427 = vmatprep.subr.mxu0 0.0
      %428 = vmatpush1.msra.mxu0 0.0
      %429 = vmatprep.subr.mxu0 0.0
      %430 = vmatpush1.msra.mxu0 0.0
      %431 = vmatprep.subr.mxu0 0.0
      %432 = vmatpush1.msra.mxu0 0.0
      %433 = vmatprep.subr.mxu0 0.0
      %434 = vmatpush1.msra.mxu0 0.0
      %435 = vmatprep.subr.mxu0 0.0
      %436 = vmatpush1.msra.mxu0 0.0
      %437 = vmatprep.subr.mxu0 0.0
      %438 = vmatpush1.msra.mxu0 0.0
      %439 = vmatprep.subr.mxu0 0.0
      %440 = vmatpush1.msra.mxu0 0.0
      %441 = vmatprep.subr.mxu0 0.0
      %442 = vmatpush1.msra.mxu0 0.0
      %443 = vmatprep.subr.mxu0 0.0
      %444 = vmatpush1.msra.mxu0 0.0
      %445 = vmatprep.subr.mxu0 0.0
      %446 = vmatpush1.msra.mxu0 0.0
      %447 = vmatprep.subr.mxu0 0.0
      %448 = vmatpush1.msra.mxu0 0.0
      %449 = vmatprep.subr.mxu0 0.0
      %450 = vmatpush1.msra.mxu0 0.0
      %451 = vmatprep.subr.mxu0 0.0
      %452 = vmatpush1.msra.mxu0 0.0
      %453 = vmatprep.subr.mxu0 0.0
      %454 = vmatpush1.msra.mxu0 0.0
      %455 = vmatprep.subr.mxu0 0.0
      %456 = vmatpush1.msra.mxu0 0.0
      %457 = vmatprep.subr.mxu0 0.0
      %458 = vmatpush1.msra.mxu0 0.0
      %459 = vmatprep.subr.mxu0 0.0
      %460 = vmatpush1.msra.mxu0 0.0
      %461 = vmatprep.subr.mxu0 0.0
      %462 = vmatpush1.msra.mxu0 0.0
      %463 = vmatprep.subr.mxu0 0.0
      %464 = vmatpush1.msra.mxu0 0.0
      %465 = vmatprep.mubr.f32.mxu0 0.0
      %466 = vmatmul.mubr.f32.gmra.mrb[0].mxu0 %v333
      %v467 = vpop.f32.mrb[0].mxu0
      %v468 = vadd.f32 0.0, %v467
      %v469 = vpop.f32.mrb[0].mxu0
      %470 = vmatprep.mubr.f32.mxu0 0.0
      %471 = vmatmul.mubr.f32.gmra.mrb[0].mxu0 %v335
      %v472 = vpop.f32.mrb[0].mxu0
      %v473 = vadd.f32 0.0, %v472
      %v474 = vpop.f32.mrb[0].mxu0
      %475 = vmatprep.mubr.f32.mxu0 0.0
      %476 = vmatmul.mubr.f32.gmra.mrb[0].mxu0 %v337
      %v477 = vpop.f32.mrb[0].mxu0
      %v478 = vadd.f32 0.0, %v477
      %v479 = vpop.f32.mrb[0].mxu0
      %480 = vmatprep.mubr.f32.mxu0 0.0
      %481 = vmatmul.mubr.f32.gmra.mrb[0].mxu0 %v339
      %v482 = vpop.f32.mrb[0].mxu0
      %v483 = vadd.f32 0.0, %v482
      %v484 = vpop.f32.mrb[0].mxu0
      %485 = vmatprep.mubr.f32.mxu0 0.0
      %486 = vmatmul.mubr.f32.gmra.mrb[0].mxu0 %v341
      %v487 = vpop.f32.mrb[0].mxu0
      %v488 = vadd.f32 0.0, %v487
      %v489 = vpop.f32.mrb[0].mxu0
      %490 = vmatprep.mubr.f32.mxu0 0.0
      %491 = vmatmul.mubr.f32.gmra.mrb[0].mxu0 %v343
      %v492 = vpop.f32.mrb[0].mxu0
      %v493 = vadd.f32 0.0, %v492
      %v494 = vpop.f32.mrb[0].mxu0
      %495 = vmatprep.mubr.f32.mxu0 0.0
      %496 = vmatmul.mubr.f32.gmra.mrb[0].mxu0 %v345
      %v497 = vpop.f32.mrb[0].mxu0
      %v498 = vadd.f32 0.0, %v497
      %v499 = vpop.f32.mrb[0].mxu0
      %500 = vmatprep.mubr.f32.mxu0 0.0
      %501 = vmatmul.mubr.f32.gmra.mrb[0].mxu0 %v347
      %v502 = vpop.f32.mrb[0].mxu0
      %v503 = vadd.f32 0.0, %v502
      %v504 = vpop.f32.mrb[0].mxu0
      %505 = vmatprep.mubr.f32.mxu0 0.0
      %506 = vmatmul.mubr.f32.gmra.mrb[0].mxu0 %v349
      %v507 = vpop.f32.mrb[0].mxu0
      %v508 = vadd.f32 0.0, %v507
      %v509 = vpop.f32.mrb[0].mxu0
      %510 = vmatprep.mubr.f32.mxu0 0.0
      %511 = vmatmul.mubr.f32.gmra.mrb[0].mxu0 %v351
      %v512 = vpop.f32.mrb[0].mxu0
      %v513 = vadd.f32 0.0, %v512
      %v514 = vpop.f32.mrb[0].mxu0
      %515 = vmatprep.mubr.f32.mxu0 0.0
      %516 = vmatmul.mubr.f32.gmra.mrb[0].mxu0 %v353
      %v517 = vpop.f32.mrb[0].mxu0
      %v518 = vadd.f32 0.0, %v517
      %v519 = vpop.f32.mrb[0].mxu0
      %520 = vmatprep.mubr.f32.mxu0 0.0
      %521 = vmatmul.mubr.f32.gmra.mrb[0].mxu0 %v355
      %v522 = vpop.f32.mrb[0].mxu0
      %v523 = vadd.f32 0.0, %v522
      %v524 = vpop.f32.mrb[0].mxu0
      %525 = vmatprep.mubr.f32.mxu0 0.0
      %526 = vmatmul.mubr.f32.gmra.mrb[0].mxu0 %v357
      %v527 = vpop.f32.mrb[0].mxu0
      %v528 = vadd.f32 0.0, %v527
      %v529 = vpop.f32.mrb[0].mxu0
      %530 = vmatprep.mubr.f32.mxu0 0.0
      %531 = vmatmul.mubr.f32.gmra.mrb[0].mxu0 %v359
      %v532 = vpop.f32.mrb[0].mxu0
      %v533 = vadd.f32 0.0, %v532
      %v534 = vpop.f32.mrb[0].mxu0
      %535 = vmatprep.mubr.f32.mxu0 0.0
      %536 = vmatmul.mubr.f32.gmra.mrb[0].mxu0 %v361
      %v537 = vpop.f32.mrb[0].mxu0
      %v538 = vadd.f32 0.0, %v537
      %v539 = vpop.f32.mrb[0].mxu0
      %540 = vmatprep.mubr.f32.mxu0 0.0
      %541 = vmatmul.mubr.f32.gmra.mrb[0].mxu0 %v363
      %v542 = vpop.f32.mrb[0].mxu0
      %v543 = vadd.f32 0.0, %v542
      %v544 = vpop.f32.mrb[0].mxu0
      %545 = vmatprep.mubr.f32.mxu0 0.0
      %546 = vmatmul.mubr.f32.gmra.mrb[0].mxu0 %v365
      %v547 = vpop.f32.mrb[0].mxu0
      %v548 = vadd.f32 0.0, %v547
      %v549 = vpop.f32.mrb[0].mxu0
      %550 = vmatprep.mubr.f32.mxu0 0.0
      %551 = vmatmul.mubr.f32.gmra.mrb[0].mxu0 %v367
      %v552 = vpop.f32.mrb[0].mxu0
      %v553 = vadd.f32 0.0, %v552
      %v554 = vpop.f32.mrb[0].mxu0
      %555 = vmatprep.mubr.f32.mxu0 0.0
      %556 = vmatmul.mubr.f32.gmra.mrb[0].mxu0 %v369
      %v557 = vpop.f32.mrb[0].mxu0
      %v558 = vadd.f32 0.0, %v557
      %v559 = vpop.f32.mrb[0].mxu0
      %560 = vmatprep.mubr.f32.mxu0 0.0
      %561 = vmatmul.mubr.f32.gmra.mrb[0].mxu0 %v371
      %v562 = vpop.f32.mrb[0].mxu0
      %v563 = vadd.f32 0.0, %v562
      %v564 = vpop.f32.mrb[0].mxu0
      %565 = vmatprep.mubr.f32.mxu0 0.0
      %566 = vmatmul.mubr.f32.gmra.mrb[0].mxu0 %v373
      %v567 = vpop.f32.mrb[0].mxu0
      %v568 = vadd.f32 0.0, %v567
      %v569 = vpop.f32.mrb[0].mxu0
      %570 = vmatprep.mubr.f32.mxu0 0.0
      %571 = vmatmul.mubr.f32.gmra.mrb[0].mxu0 %v375
      %v572 = vpop.f32.mrb[0].mxu0
      %v573 = vadd.f32 0.0, %v572
      %v574 = vpop.f32.mrb[0].mxu0
      %575 = vmatprep.mubr.f32.mxu0 0.0
      %576 = vmatmul.mubr.f32.gmra.mrb[0].mxu0 %v377
      %v577 = vpop.f32.mrb[0].mxu0
      %v578 = vadd.f32 0.0, %v577
      %v579 = vpop.f32.mrb[0].mxu0
      %580 = vmatprep.mubr.f32.mxu0 0.0
      %581 = vmatmul.mubr.f32.gmra.mrb[0].mxu0 %v379
      %v582 = vpop.f32.mrb[0].mxu0
      %v583 = vadd.f32 0.0, %v582
      %v584 = vpop.f32.mrb[0].mxu0
      %585 = vmatprep.mubr.f32.mxu0 0.0
      %586 = vmatmul.mubr.f32.gmra.mrb[0].mxu0 %v381
      %v587 = vpop.f32.mrb[0].mxu0
      %v588 = vadd.f32 0.0, %v587
      %v589 = vpop.f32.mrb[0].mxu0
      %590 = vmatprep.mubr.f32.mxu0 0.0
      %591 = vmatmul.mubr.f32.gmra.mrb[0].mxu0 %v383
      %v592 = vpop.f32.mrb[0].mxu0
      %v593 = vadd.f32 0.0, %v592
      %v594 = vpop.f32.mrb[0].mxu0
      %595 = vmatprep.mubr.f32.mxu0 0.0
      %596 = vmatmul.mubr.f32.gmra.mrb[0].mxu0 %v385
      %v597 = vpop.f32.mrb[0].mxu0
      %v598 = vadd.f32 0.0, %v597
      %v599 = vpop.f32.mrb[0].mxu0
      %600 = vmatprep.mubr.f32.mxu0 0.0
      %601 = vmatmul.mubr.f32.gmra.mrb[0].mxu0 %v387
      %v602 = vpop.f32.mrb[0].mxu0
      %v603 = vadd.f32 0.0, %v602
      %v604 = vpop.f32.mrb[0].mxu0
      %605 = vmatprep.mubr.f32.mxu0 0.0
      %606 = vmatmul.mubr.f32.gmra.mrb[0].mxu0 %v389
      %v607 = vpop.f32.mrb[0].mxu0
      %v608 = vadd.f32 0.0, %v607
      %v609 = vpop.f32.mrb[0].mxu0
      %610 = vmatprep.mubr.f32.mxu0 0.0
      %611 = vmatmul.mubr.f32.gmra.mrb[0].mxu0 %v391
      %v612 = vpop.f32.mrb[0].mxu0
      %v613 = vadd.f32 0.0, %v612
      %v614 = vpop.f32.mrb[0].mxu0
      %615 = vmatprep.mubr.f32.mxu0 0.0
      %616 = vmatmul.mubr.f32.gmra.mrb[0].mxu0 %v393
      %v617 = vpop.f32.mrb[0].mxu0
      %v618 = vadd.f32 0.0, %v617
      %v619 = vpop.f32.mrb[0].mxu0
      %620 = vmatprep.mubr.f32.mxu0 0.0
      %621 = vmatmul.mubr.f32.gmra.mrb[0].mxu0 %v395
      %v622 = vpop.f32.mrb[0].mxu0
      %v623 = vadd.f32 0.0, %v622
      %v624 = vpop.f32.mrb[0].mxu0
      %625 = vdwg.mxu0
      %v626 = vsel %vm332, %v144, 0
      %v628 = vsel %vm332, %v145, 0
      %v630 = vsel %vm332, %v147, 0
      %v632 = vsel %vm332, %v148, 0
      %v634 = vsel %vm332, %v150, 0
      %v636 = vsel %vm332, %v151, 0
      %v638 = vsel %vm332, %v153, 0
      %v640 = vsel %vm332, %v154, 0
      %v642 = vsel %vm332, %v156, 0
      %v644 = vsel %vm332, %v157, 0
      %v646 = vsel %vm332, %v159, 0
      %v648 = vsel %vm332, %v160, 0
      %v650 = vsel %vm332, %v162, 0
      %v652 = vsel %vm332, %v163, 0
      %v654 = vsel %vm332, %v165, 0
      %v656 = vsel %vm332, %v166, 0
      %v658 = vsel %vm332, %v168, 0
      %v660 = vsel %vm332, %v169, 0
      %v662 = vsel %vm332, %v171, 0
      %v664 = vsel %vm332, %v172, 0
      %v666 = vsel %vm332, %v174, 0
      %v668 = vsel %vm332, %v175, 0
      %v670 = vsel %vm332, %v177, 0
      %v672 = vsel %vm332, %v178, 0
      %v674 = vsel %vm332, %v180, 0
      %v676 = vsel %vm332, %v181, 0
      %v678 = vsel %vm332, %v183, 0
      %v680 = vsel %vm332, %v184, 0
      %v682 = vsel %vm332, %v186, 0
      %v684 = vsel %vm332, %v187, 0
      %v686 = vsel %vm332, %v189, 0
      %v688 = vsel %vm332, %v190, 0
      %v691 = vsel %vm397, %v196, 0
      %693 = vmatprep.subr.mxu0 0.0
      %694 = vmatpush1.msra.mxu0 %v195
      %695 = vmatprep.subr.mxu0 0.0
      %696 = vmatpush1.msra.mxu0 %v691
      %697 = vmatprep.subr.mxu0 0.0
      %698 = vmatpush1.msra.mxu0 0.0
      %699 = vmatprep.subr.mxu0 0.0
      %700 = vmatpush1.msra.mxu0 0.0
      %701 = vmatprep.subr.mxu0 0.0
      %702 = vmatpush1.msra.mxu0 0.0
      %703 = vmatprep.subr.mxu0 0.0
      %704 = vmatpush1.msra.mxu0 0.0
      %705 = vmatprep.subr.mxu0 0.0
      %706 = vmatpush1.msra.mxu0 0.0
      %707 = vmatprep.subr.mxu0 0.0
      %708 = vmatpush1.msra.mxu0 0.0
      %709 = vmatprep.subr.mxu0 0.0
      %710 = vmatpush1.msra.mxu0 0.0
      %711 = vmatprep.subr.mxu0 0.0
      %712 = vmatpush1.msra.mxu0 0.0
      %713 = vmatprep.subr.mxu0 0.0
      %714 = vmatpush1.msra.mxu0 0.0
      %715 = vmatprep.subr.mxu0 0.0
      %716 = vmatpush1.msra.mxu0 0.0
      %717 = vmatprep.subr.mxu0 0.0
      %718 = vmatpush1.msra.mxu0 0.0
      %719 = vmatprep.subr.mxu0 0.0
      %720 = vmatpush1.msra.mxu0 0.0
      %721 = vmatprep.subr.mxu0 0.0
      %722 = vmatpush1.msra.mxu0 0.0
      %723 = vmatprep.subr.mxu0 0.0
      %724 = vmatpush1.msra.mxu0 0.0
      %725 = vmatprep.subr.mxu0 0.0
      %726 = vmatpush1.msra.mxu0 0.0
      %727 = vmatprep.subr.mxu0 0.0
      %728 = vmatpush1.msra.mxu0 0.0
      %729 = vmatprep.subr.mxu0 0.0
      %730 = vmatpush1.msra.mxu0 0.0
      %731 = vmatprep.subr.mxu0 0.0
      %732 = vmatpush1.msra.mxu0 0.0
      %733 = vmatprep.subr.mxu0 0.0
      %734 = vmatpush1.msra.mxu0 0.0
      %735 = vmatprep.subr.mxu0 0.0
      %736 = vmatpush1.msra.mxu0 0.0
      %737 = vmatprep.subr.mxu0 0.0
      %738 = vmatpush1.msra.mxu0 0.0
      %739 = vmatprep.subr.mxu0 0.0
      %740 = vmatpush1.msra.mxu0 0.0
      %741 = vmatprep.subr.mxu0 0.0
      %742 = vmatpush1.msra.mxu0 0.0
      %743 = vmatprep.subr.mxu0 0.0
      %744 = vmatpush1.msra.mxu0 0.0
      %745 = vmatprep.subr.mxu0 0.0
      %746 = vmatpush1.msra.mxu0 0.0
      %747 = vmatprep.subr.mxu0 0.0
      %748 = vmatpush1.msra.mxu0 0.0
      %749 = vmatprep.subr.mxu0 0.0
      %750 = vmatpush1.msra.mxu0 0.0
      %751 = vmatprep.subr.mxu0 0.0
      %752 = vmatpush1.msra.mxu0 0.0
      %753 = vmatprep.subr.mxu0 0.0
      %754 = vmatpush1.msra.mxu0 0.0
      %755 = vmatprep.subr.mxu0 0.0
      %756 = vmatpush1.msra.mxu0 0.0
      %757 = vmatprep.mubr.f32.mxu0 0.0
      %758 = vmatmul.mubr.f32.gmra.mrb[0].mxu0 %v626
      %v759 = vpop.f32.mrb[0].mxu0
      %v760 = vadd.f32 %v468, %v759
      %v761 = vpop.f32.mrb[0].mxu0
      %762 = vmatprep.mubr.f32.mxu0 0.0
      %763 = vmatmul.mubr.f32.gmra.mrb[0].mxu0 %v628
      %v764 = vpop.f32.mrb[0].mxu0
      %v765 = vadd.f32 %v473, %v764
      %v766 = vpop.f32.mrb[0].mxu0
      %767 = vmatprep.mubr.f32.mxu0 0.0
      %768 = vmatmul.mubr.f32.gmra.mrb[0].mxu0 %v630
      %v769 = vpop.f32.mrb[0].mxu0
      %v770 = vadd.f32 %v478, %v769
      %v771 = vpop.f32.mrb[0].mxu0
      %772 = vmatprep.mubr.f32.mxu0 0.0
      %773 = vmatmul.mubr.f32.gmra.mrb[0].mxu0 %v632
      %v774 = vpop.f32.mrb[0].mxu0
      %v775 = vadd.f32 %v483, %v774
      %v776 = vpop.f32.mrb[0].mxu0
      %777 = vmatprep.mubr.f32.mxu0 0.0
      %778 = vmatmul.mubr.f32.gmra.mrb[0].mxu0 %v634
      %v779 = vpop.f32.mrb[0].mxu0
      %v780 = vadd.f32 %v488, %v779
      %v781 = vpop.f32.mrb[0].mxu0
      %782 = vmatprep.mubr.f32.mxu0 0.0
      %783 = vmatmul.mubr.f32.gmra.mrb[0].mxu0 %v636
      %v784 = vpop.f32.mrb[0].mxu0
      %v785 = vadd.f32 %v493, %v784
      %v786 = vpop.f32.mrb[0].mxu0
      %787 = vmatprep.mubr.f32.mxu0 0.0
      %788 = vmatmul.mubr.f32.gmra.mrb[0].mxu0 %v638
      %v789 = vpop.f32.mrb[0].mxu0
      %v790 = vadd.f32 %v498, %v789
      %v791 = vpop.f32.mrb[0].mxu0
      %792 = vmatprep.mubr.f32.mxu0 0.0
      %793 = vmatmul.mubr.f32.gmra.mrb[0].mxu0 %v640
      %v794 = vpop.f32.mrb[0].mxu0
      %v795 = vadd.f32 %v503, %v794
      %v796 = vpop.f32.mrb[0].mxu0
      %797 = vmatprep.mubr.f32.mxu0 0.0
      %798 = vmatmul.mubr.f32.gmra.mrb[0].mxu0 %v642
      %v799 = vpop.f32.mrb[0].mxu0
      %v800 = vadd.f32 %v508, %v799
      %v801 = vpop.f32.mrb[0].mxu0
      %802 = vmatprep.mubr.f32.mxu0 0.0
      %803 = vmatmul.mubr.f32.gmra.mrb[0].mxu0 %v644
      %v804 = vpop.f32.mrb[0].mxu0
      %v805 = vadd.f32 %v513, %v804
      %v806 = vpop.f32.mrb[0].mxu0
      %807 = vmatprep.mubr.f32.mxu0 0.0
      %808 = vmatmul.mubr.f32.gmra.mrb[0].mxu0 %v646
      %v809 = vpop.f32.mrb[0].mxu0
      %v810 = vadd.f32 %v518, %v809
      %v811 = vpop.f32.mrb[0].mxu0
      %812 = vmatprep.mubr.f32.mxu0 0.0
      %813 = vmatmul.mubr.f32.gmra.mrb[0].mxu0 %v648
      %v814 = vpop.f32.mrb[0].mxu0
      %v815 = vadd.f32 %v523, %v814
      %v816 = vpop.f32.mrb[0].mxu0
      %817 = vmatprep.mubr.f32.mxu0 0.0
      %818 = vmatmul.mubr.f32.gmra.mrb[0].mxu0 %v650
      %v819 = vpop.f32.mrb[0].mxu0
      %v820 = vadd.f32 %v528, %v819
      %v821 = vpop.f32.mrb[0].mxu0
      %822 = vmatprep.mubr.f32.mxu0 0.0
      %823 = vmatmul.mubr.f32.gmra.mrb[0].mxu0 %v652
      %v824 = vpop.f32.mrb[0].mxu0
      %v825 = vadd.f32 %v533, %v824
      %v826 = vpop.f32.mrb[0].mxu0
      %827 = vmatprep.mubr.f32.mxu0 0.0
      %828 = vmatmul.mubr.f32.gmra.mrb[0].mxu0 %v654
      %v829 = vpop.f32.mrb[0].mxu0
      %v830 = vadd.f32 %v538, %v829
      %v831 = vpop.f32.mrb[0].mxu0
      %832 = vmatprep.mubr.f32.mxu0 0.0
      %833 = vmatmul.mubr.f32.gmra.mrb[0].mxu0 %v656
      %v834 = vpop.f32.mrb[0].mxu0
      %v835 = vadd.f32 %v543, %v834
      %v836 = vpop.f32.mrb[0].mxu0
      %837 = vmatprep.mubr.f32.mxu0 0.0
      %838 = vmatmul.mubr.f32.gmra.mrb[0].mxu0 %v658
      %v839 = vpop.f32.mrb[0].mxu0
      %v840 = vadd.f32 %v548, %v839
      %v841 = vpop.f32.mrb[0].mxu0
      %842 = vmatprep.mubr.f32.mxu0 0.0
      %843 = vmatmul.mubr.f32.gmra.mrb[0].mxu0 %v660
      %v844 = vpop.f32.mrb[0].mxu0
      %v845 = vadd.f32 %v553, %v844
      %v846 = vpop.f32.mrb[0].mxu0
      %847 = vmatprep.mubr.f32.mxu0 0.0
      %848 = vmatmul.mubr.f32.gmra.mrb[0].mxu0 %v662
      %v849 = vpop.f32.mrb[0].mxu0
      %v850 = vadd.f32 %v558, %v849
      %v851 = vpop.f32.mrb[0].mxu0
      %852 = vmatprep.mubr.f32.mxu0 0.0
      %853 = vmatmul.mubr.f32.gmra.mrb[0].mxu0 %v664
      %v854 = vpop.f32.mrb[0].mxu0
      %v855 = vadd.f32 %v563, %v854
      %v856 = vpop.f32.mrb[0].mxu0
      %857 = vmatprep.mubr.f32.mxu0 0.0
      %858 = vmatmul.mubr.f32.gmra.mrb[0].mxu0 %v666
      %v859 = vpop.f32.mrb[0].mxu0
      %v860 = vadd.f32 %v568, %v859
      %v861 = vpop.f32.mrb[0].mxu0
      %862 = vmatprep.mubr.f32.mxu0 0.0
      %863 = vmatmul.mubr.f32.gmra.mrb[0].mxu0 %v668
      %v864 = vpop.f32.mrb[0].mxu0
      %v865 = vadd.f32 %v573, %v864
      %v866 = vpop.f32.mrb[0].mxu0
      %867 = vmatprep.mubr.f32.mxu0 0.0
      %868 = vmatmul.mubr.f32.gmra.mrb[0].mxu0 %v670
      %v869 = vpop.f32.mrb[0].mxu0
      %v870 = vadd.f32 %v578, %v869
      %v871 = vpop.f32.mrb[0].mxu0
      %872 = vmatprep.mubr.f32.mxu0 0.0
      %873 = vmatmul.mubr.f32.gmra.mrb[0].mxu0 %v672
      %v874 = vpop.f32.mrb[0].mxu0
      %v875 = vadd.f32 %v583, %v874
      %v876 = vpop.f32.mrb[0].mxu0
      %877 = vmatprep.mubr.f32.mxu0 0.0
      %878 = vmatmul.mubr.f32.gmra.mrb[0].mxu0 %v674
      %v879 = vpop.f32.mrb[0].mxu0
      %v880 = vadd.f32 %v588, %v879
      %v881 = vpop.f32.mrb[0].mxu0
      %882 = vmatprep.mubr.f32.mxu0 0.0
      %883 = vmatmul.mubr.f32.gmra.mrb[0].mxu0 %v676
      %v884 = vpop.f32.mrb[0].mxu0
      %v885 = vadd.f32 %v593, %v884
      %v886 = vpop.f32.mrb[0].mxu0
      %887 = vmatprep.mubr.f32.mxu0 0.0
      %888 = vmatmul.mubr.f32.gmra.mrb[0].mxu0 %v678
      %v889 = vpop.f32.mrb[0].mxu0
      %v890 = vadd.f32 %v598, %v889
      %v891 = vpop.f32.mrb[0].mxu0
      %892 = vmatprep.mubr.f32.mxu0 0.0
      %893 = vmatmul.mubr.f32.gmra.mrb[0].mxu0 %v680
      %v894 = vpop.f32.mrb[0].mxu0
      %v895 = vadd.f32 %v603, %v894
      %v896 = vpop.f32.mrb[0].mxu0
      %897 = vmatprep.mubr.f32.mxu0 0.0
      %898 = vmatmul.mubr.f32.gmra.mrb[0].mxu0 %v682
      %v899 = vpop.f32.mrb[0].mxu0
      %v900 = vadd.f32 %v608, %v899
      %v901 = vpop.f32.mrb[0].mxu0
      %902 = vmatprep.mubr.f32.mxu0 0.0
      %903 = vmatmul.mubr.f32.gmra.mrb[0].mxu0 %v684
      %v904 = vpop.f32.mrb[0].mxu0
      %v905 = vadd.f32 %v613, %v904
      %v906 = vpop.f32.mrb[0].mxu0
      %907 = vmatprep.mubr.f32.mxu0 0.0
      %908 = vmatmul.mubr.f32.gmra.mrb[0].mxu0 %v686
      %v909 = vpop.f32.mrb[0].mxu0
      %v910 = vadd.f32 %v618, %v909
      %v911 = vpop.f32.mrb[0].mxu0
      %912 = vmatprep.mubr.f32.mxu0 0.0
      %913 = vmatmul.mubr.f32.gmra.mrb[0].mxu0 %v688
      %v914 = vpop.f32.mrb[0].mxu0
      %v915 = vadd.f32 %v623, %v914
      %v916 = vpop.f32.mrb[0].mxu0
      %917 = vdwg.mxu0
      %v919 = vsel %vm332, %v192, 0
      %v922 = vsel %vm332, %v193, 0
      %v925 = vsel %vm397, %v200, 0
      %927 = vmatprep.subr.mxu0 0.0
      %928 = vmatpush1.msra.mxu0 %v199
      %929 = vmatprep.subr.mxu0 0.0
      %930 = vmatpush1.msra.mxu0 %v925
      %931 = vmatprep.subr.mxu0 0.0
      %932 = vmatpush1.msra.mxu0 0.0
      %933 = vmatprep.subr.mxu0 0.0
      %934 = vmatpush1.msra.mxu0 0.0
      %935 = vmatprep.subr.mxu0 0.0
      %936 = vmatpush1.msra.mxu0 0.0
      %937 = vmatprep.subr.mxu0 0.0
      %938 = vmatpush1.msra.mxu0 0.0
      %939 = vmatprep.subr.mxu0 0.0
      %940 = vmatpush1.msra.mxu0 0.0
      %941 = vmatprep.subr.mxu0 0.0
      %942 = vmatpush1.msra.mxu0 0.0
      %943 = vmatprep.subr.mxu0 0.0
      %944 = vmatpush1.msra.mxu0 0.0
      %945 = vmatprep.subr.mxu0 0.0
      %946 = vmatpush1.msra.mxu0 0.0
      %947 = vmatprep.subr.mxu0 0.0
      %948 = vmatpush1.msra.mxu0 0.0
      %949 = vmatprep.subr.mxu0 0.0
      %950 = vmatpush1.msra.mxu0 0.0
      %951 = vmatprep.subr.mxu0 0.0
      %952 = vmatpush1.msra.mxu0 0.0
      %953 = vmatprep.subr.mxu0 0.0
      %954 = vmatpush1.msra.mxu0 0.0
      %955 = vmatprep.subr.mxu0 0.0
      %956 = vmatpush1.msra.mxu0 0.0
      %957 = vmatprep.subr.mxu0 0.0
      %958 = vmatpush1.msra.mxu0 0.0
      %959 = vmatprep.subr.mxu0 0.0
      %960 = vmatpush1.msra.mxu0 0.0
      %961 = vmatprep.subr.mxu0 0.0
      %962 = vmatpush1.msra.mxu0 0.0
      %963 = vmatprep.subr.mxu0 0.0
      %964 = vmatpush1.msra.mxu0 0.0
      %965 = vmatprep.subr.mxu0 0.0
      %966 = vmatpush1.msra.mxu0 0.0
      %967 = vmatprep.subr.mxu0 0.0
      %968 = vmatpush1.msra.mxu0 0.0
      %969 = vmatprep.subr.mxu0 0.0
      %970 = vmatpush1.msra.mxu0 0.0
      %971 = vmatprep.subr.mxu0 0.0
      %972 = vmatpush1.msra.mxu0 0.0
      %973 = vmatprep.subr.mxu0 0.0
      %974 = vmatpush1.msra.mxu0 0.0
      %975 = vmatprep.subr.mxu0 0.0
      %976 = vmatpush1.msra.mxu0 0.0
      %977 = vmatprep.subr.mxu0 0.0
      %978 = vmatpush1.msra.mxu0 0.0
      %979 = vmatprep.subr.mxu0 0.0
      %980 = vmatpush1.msra.mxu0 0.0
      %981 = vmatprep.subr.mxu0 0.0
      %982 = vmatpush1.msra.mxu0 0.0
      %983 = vmatprep.subr.mxu0 0.0
      %984 = vmatpush1.msra.mxu0 0.0
      %985 = vmatprep.subr.mxu0 0.0
      %986 = vmatpush1.msra.mxu0 0.0
      %987 = vmatprep.subr.mxu0 0.0
      %988 = vmatpush1.msra.mxu0 0.0
      %989 = vmatprep.subr.mxu0 0.0
      %990 = vmatpush1.msra.mxu0 0.0
      %991 = vmatprep.mubr.f32.mxu0 0.0
      %992 = vmatmul.mubr.f32.gmra.mrb[0].mxu0 %v630
      %v993 = vpop.f32.mrb[0].mxu0
      %v994 = vadd.f32 0.0, %v993
      %v995 = vpop.f32.mrb[0].mxu0
      %996 = vmatprep.mubr.f32.mxu0 0.0
      %997 = vmatmul.mubr.f32.gmra.mrb[0].mxu0 %v632
      %v998 = vpop.f32.mrb[0].mxu0
      %v999 = vadd.f32 0.0, %v998
      %v1000 = vpop.f32.mrb[0].mxu0
      %1001 = vmatprep.mubr.f32.mxu0 0.0
      %1002 = vmatmul.mubr.f32.gmra.mrb[0].mxu0 %v634
      %v1003 = vpop.f32.mrb[0].mxu0
      %v1004 = vadd.f32 0.0, %v1003
      %v1005 = vpop.f32.mrb[0].mxu0
      %1006 = vmatprep.mubr.f32.mxu0 0.0
      %1007 = vmatmul.mubr.f32.gmra.mrb[0].mxu0 %v636
      %v1008 = vpop.f32.mrb[0].mxu0
      %v1009 = vadd.f32 0.0, %v1008
      %v1010 = vpop.f32.mrb[0].mxu0
      %1011 = vmatprep.mubr.f32.mxu0 0.0
      %1012 = vmatmul.mubr.f32.gmra.mrb[0].mxu0 %v638
      %v1013 = vpop.f32.mrb[0].mxu0
      %v1014 = vadd.f32 0.0, %v1013
      %v1015 = vpop.f32.mrb[0].mxu0
      %1016 = vmatprep.mubr.f32.mxu0 0.0
      %1017 = vmatmul.mubr.f32.gmra.mrb[0].mxu0 %v640
      %v1018 = vpop.f32.mrb[0].mxu0
      %v1019 = vadd.f32 0.0, %v1018
      %v1020 = vpop.f32.mrb[0].mxu0
      %1021 = vmatprep.mubr.f32.mxu0 0.0
      %1022 = vmatmul.mubr.f32.gmra.mrb[0].mxu0 %v642
      %v1023 = vpop.f32.mrb[0].mxu0
      %v1024 = vadd.f32 0.0, %v1023
      %v1025 = vpop.f32.mrb[0].mxu0
      %1026 = vmatprep.mubr.f32.mxu0 0.0
      %1027 = vmatmul.mubr.f32.gmra.mrb[0].mxu0 %v644
      %v1028 = vpop.f32.mrb[0].mxu0
      %v1029 = vadd.f32 0.0, %v1028
      %v1030 = vpop.f32.mrb[0].mxu0
      %1031 = vmatprep.mubr.f32.mxu0 0.0
      %1032 = vmatmul.mubr.f32.gmra.mrb[0].mxu0 %v646
      %v1033 = vpop.f32.mrb[0].mxu0
      %v1034 = vadd.f32 0.0, %v1033
      %v1035 = vpop.f32.mrb[0].mxu0
      %1036 = vmatprep.mubr.f32.mxu0 0.0
      %1037 = vmatmul.mubr.f32.gmra.mrb[0].mxu0 %v648
      %v1038 = vpop.f32.mrb[0].mxu0
      %v1039 = vadd.f32 0.0, %v1038
      %v1040 = vpop.f32.mrb[0].mxu0
      %1041 = vmatprep.mubr.f32.mxu0 0.0
      %1042 = vmatmul.mubr.f32.gmra.mrb[0].mxu0 %v650
      %v1043 = vpop.f32.mrb[0].mxu0
      %v1044 = vadd.f32 0.0, %v1043
      %v1045 = vpop.f32.mrb[0].mxu0
      %1046 = vmatprep.mubr.f32.mxu0 0.0
      %1047 = vmatmul.mubr.f32.gmra.mrb[0].mxu0 %v652
      %v1048 = vpop.f32.mrb[0].mxu0
      %v1049 = vadd.f32 0.0, %v1048
      %v1050 = vpop.f32.mrb[0].mxu0
      %1051 = vmatprep.mubr.f32.mxu0 0.0
      %1052 = vmatmul.mubr.f32.gmra.mrb[0].mxu0 %v654
      %v1053 = vpop.f32.mrb[0].mxu0
      %v1054 = vadd.f32 0.0, %v1053
      %v1055 = vpop.f32.mrb[0].mxu0
      %1056 = vmatprep.mubr.f32.mxu0 0.0
      %1057 = vmatmul.mubr.f32.gmra.mrb[0].mxu0 %v656
      %v1058 = vpop.f32.mrb[0].mxu0
      %v1059 = vadd.f32 0.0, %v1058
      %v1060 = vpop.f32.mrb[0].mxu0
      %1061 = vmatprep.mubr.f32.mxu0 0.0
      %1062 = vmatmul.mubr.f32.gmra.mrb[0].mxu0 %v658
      %v1063 = vpop.f32.mrb[0].mxu0
      %v1064 = vadd.f32 0.0, %v1063
      %v1065 = vpop.f32.mrb[0].mxu0
      %1066 = vmatprep.mubr.f32.mxu0 0.0
      %1067 = vmatmul.mubr.f32.gmra.mrb[0].mxu0 %v660
      %v1068 = vpop.f32.mrb[0].mxu0
      %v1069 = vadd.f32 0.0, %v1068
      %v1070 = vpop.f32.mrb[0].mxu0
      %1071 = vmatprep.mubr.f32.mxu0 0.0
      %1072 = vmatmul.mubr.f32.gmra.mrb[0].mxu0 %v662
      %v1073 = vpop.f32.mrb[0].mxu0
      %v1074 = vadd.f32 0.0, %v1073
      %v1075 = vpop.f32.mrb[0].mxu0
      %1076 = vmatprep.mubr.f32.mxu0 0.0
      %1077 = vmatmul.mubr.f32.gmra.mrb[0].mxu0 %v664
      %v1078 = vpop.f32.mrb[0].mxu0
      %v1079 = vadd.f32 0.0, %v1078
      %v1080 = vpop.f32.mrb[0].mxu0
      %1081 = vmatprep.mubr.f32.mxu0 0.0
      %1082 = vmatmul.mubr.f32.gmra.mrb[0].mxu0 %v666
      %v1083 = vpop.f32.mrb[0].mxu0
      %v1084 = vadd.f32 0.0, %v1083
      %v1085 = vpop.f32.mrb[0].mxu0
      %1086 = vmatprep.mubr.f32.mxu0 0.0
      %1087 = vmatmul.mubr.f32.gmra.mrb[0].mxu0 %v668
      %v1088 = vpop.f32.mrb[0].mxu0
      %v1089 = vadd.f32 0.0, %v1088
      %v1090 = vpop.f32.mrb[0].mxu0
      %1091 = vmatprep.mubr.f32.mxu0 0.0
      %1092 = vmatmul.mubr.f32.gmra.mrb[0].mxu0 %v670
      %v1093 = vpop.f32.mrb[0].mxu0
      %v1094 = vadd.f32 0.0, %v1093
      %v1095 = vpop.f32.mrb[0].mxu0
      %1096 = vmatprep.mubr.f32.mxu0 0.0
      %1097 = vmatmul.mubr.f32.gmra.mrb[0].mxu0 %v672
      %v1098 = vpop.f32.mrb[0].mxu0
      %v1099 = vadd.f32 0.0, %v1098
      %v1100 = vpop.f32.mrb[0].mxu0
      %1101 = vmatprep.mubr.f32.mxu0 0.0
      %1102 = vmatmul.mubr.f32.gmra.mrb[0].mxu0 %v674
      %v1103 = vpop.f32.mrb[0].mxu0
      %v1104 = vadd.f32 0.0, %v1103
      %v1105 = vpop.f32.mrb[0].mxu0
      %1106 = vmatprep.mubr.f32.mxu0 0.0
      %1107 = vmatmul.mubr.f32.gmra.mrb[0].mxu0 %v676
      %v1108 = vpop.f32.mrb[0].mxu0
      %v1109 = vadd.f32 0.0, %v1108
      %v1110 = vpop.f32.mrb[0].mxu0
      %1111 = vmatprep.mubr.f32.mxu0 0.0
      %1112 = vmatmul.mubr.f32.gmra.mrb[0].mxu0 %v678
      %v1113 = vpop.f32.mrb[0].mxu0
      %v1114 = vadd.f32 0.0, %v1113
      %v1115 = vpop.f32.mrb[0].mxu0
      %1116 = vmatprep.mubr.f32.mxu0 0.0
      %1117 = vmatmul.mubr.f32.gmra.mrb[0].mxu0 %v680
      %v1118 = vpop.f32.mrb[0].mxu0
      %v1119 = vadd.f32 0.0, %v1118
      %v1120 = vpop.f32.mrb[0].mxu0
      %1121 = vmatprep.mubr.f32.mxu0 0.0
      %1122 = vmatmul.mubr.f32.gmra.mrb[0].mxu0 %v682
      %v1123 = vpop.f32.mrb[0].mxu0
      %v1124 = vadd.f32 0.0, %v1123
      %v1125 = vpop.f32.mrb[0].mxu0
      %1126 = vmatprep.mubr.f32.mxu0 0.0
      %1127 = vmatmul.mubr.f32.gmra.mrb[0].mxu0 %v684
      %v1128 = vpop.f32.mrb[0].mxu0
      %v1129 = vadd.f32 0.0, %v1128
      %v1130 = vpop.f32.mrb[0].mxu0
      %1131 = vmatprep.mubr.f32.mxu0 0.0
      %1132 = vmatmul.mubr.f32.gmra.mrb[0].mxu0 %v686
      %v1133 = vpop.f32.mrb[0].mxu0
      %v1134 = vadd.f32 0.0, %v1133
      %v1135 = vpop.f32.mrb[0].mxu0
      %1136 = vmatprep.mubr.f32.mxu0 0.0
      %1137 = vmatmul.mubr.f32.gmra.mrb[0].mxu0 %v688
      %v1138 = vpop.f32.mrb[0].mxu0
      %v1139 = vadd.f32 0.0, %v1138
      %v1140 = vpop.f32.mrb[0].mxu0
      %1141 = vmatprep.mubr.f32.mxu0 0.0
      %1142 = vmatmul.mubr.f32.gmra.mrb[0].mxu0 %v919
      %v1143 = vpop.f32.mrb[0].mxu0
      %v1144 = vadd.f32 0.0, %v1143
      %v1145 = vpop.f32.mrb[0].mxu0
      %1146 = vmatprep.mubr.f32.mxu0 0.0
      %1147 = vmatmul.mubr.f32.gmra.mrb[0].mxu0 %v922
      %v1148 = vpop.f32.mrb[0].mxu0
      %v1149 = vadd.f32 0.0, %v1148
      %v1150 = vpop.f32.mrb[0].mxu0
      %1151 = vdwg.mxu0
      %v1152 = vadd.f32 %v760, %v994
      %v1153 = vadd.f32 %v765, %v999
      %v1154 = vadd.f32 %v770, %v1004
      %v1155 = vadd.f32 %v775, %v1009
      %v1156 = vadd.f32 %v780, %v1014
      %v1157 = vadd.f32 %v785, %v1019
      %v1158 = vadd.f32 %v790, %v1024
      %v1159 = vadd.f32 %v795, %v1029
      %v1160 = vadd.f32 %v800, %v1034
      %v1161 = vadd.f32 %v805, %v1039
      %v1162 = vadd.f32 %v810, %v1044
      %v1163 = vadd.f32 %v815, %v1049
      %v1164 = vadd.f32 %v820, %v1054
      %v1165 = vadd.f32 %v825, %v1059
      %v1166 = vadd.f32 %v830, %v1064
      %v1167 = vadd.f32 %v835, %v1069
      %v1168 = vadd.f32 %v840, %v1074
      %v1169 = vadd.f32 %v845, %v1079
      %v1170 = vadd.f32 %v850, %v1084
      %v1171 = vadd.f32 %v855, %v1089
      %v1172 = vadd.f32 %v860, %v1094
      %v1173 = vadd.f32 %v865, %v1099
      %v1174 = vadd.f32 %v870, %v1104
      %v1175 = vadd.f32 %v875, %v1109
      %v1176 = vadd.f32 %v880, %v1114
      %v1177 = vadd.f32 %v885, %v1119
      %v1178 = vadd.f32 %v890, %v1124
      %v1179 = vadd.f32 %v895, %v1129
      %v1180 = vadd.f32 %v900, %v1134
      %v1181 = vadd.f32 %v905, %v1139
      %v1182 = vadd.f32 %v910, %v1144
      %v1183 = vadd.f32 %v915, %v1149
      %v1185 = vrot.slane %v192, 1
      %v1186 = vrot.slane %v193, 1
      %v1187 = vsel %vm251, %v1185, %v1186
      %v1188 = vrot.slane %v194, 1
      %v1189 = vsel %vm251, %v1186, %v1188
      %v1190 = vsel %vm332, %v1187, 0
      %v1192 = vsel %vm332, %v1189, 0
      %v1195 = vsel %vm397, %v202, 0
      %1197 = vmatprep.subr.mxu0 0.0
      %1198 = vmatpush1.msra.mxu0 %v201
      %1199 = vmatprep.subr.mxu0 0.0
      %1200 = vmatpush1.msra.mxu0 %v1195
      %1201 = vmatprep.subr.mxu0 0.0
      %1202 = vmatpush1.msra.mxu0 0.0
      %1203 = vmatprep.subr.mxu0 0.0
      %1204 = vmatpush1.msra.mxu0 0.0
      %1205 = vmatprep.subr.mxu0 0.0
      %1206 = vmatpush1.msra.mxu0 0.0
      %1207 = vmatprep.subr.mxu0 0.0
      %1208 = vmatpush1.msra.mxu0 0.0
      %1209 = vmatprep.subr.mxu0 0.0
      %1210 = vmatpush1.msra.mxu0 0.0
      %1211 = vmatprep.subr.mxu0 0.0
      %1212 = vmatpush1.msra.mxu0 0.0
      %1213 = vmatprep.subr.mxu0 0.0
      %1214 = vmatpush1.msra.mxu0 0.0
      %1215 = vmatprep.subr.mxu0 0.0
      %1216 = vmatpush1.msra.mxu0 0.0
      %1217 = vmatprep.subr.mxu0 0.0
      %1218 = vmatpush1.msra.mxu0 0.0
      %1219 = vmatprep.subr.mxu0 0.0
      %1220 = vmatpush1.msra.mxu0 0.0
      %1221 = vmatprep.subr.mxu0 0.0
      %1222 = vmatpush1.msra.mxu0 0.0
      %1223 = vmatprep.subr.mxu0 0.0
      %1224 = vmatpush1.msra.mxu0 0.0
      %1225 = vmatprep.subr.mxu0 0.0
      %1226 = vmatpush1.msra.mxu0 0.0
      %1227 = vmatprep.subr.mxu0 0.0
      %1228 = vmatpush1.msra.mxu0 0.0
      %1229 = vmatprep.subr.mxu0 0.0
      %1230 = vmatpush1.msra.mxu0 0.0
      %1231 = vmatprep.subr.mxu0 0.0
      %1232 = vmatpush1.msra.mxu0 0.0
      %1233 = vmatprep.subr.mxu0 0.0
      %1234 = vmatpush1.msra.mxu0 0.0
      %1235 = vmatprep.subr.mxu0 0.0
      %1236 = vmatpush1.msra.mxu0 0.0
      %1237 = vmatprep.subr.mxu0 0.0
      %1238 = vmatpush1.msra.mxu0 0.0
      %1239 = vmatprep.subr.mxu0 0.0
      %1240 = vmatpush1.msra.mxu0 0.0
      %1241 = vmatprep.subr.mxu0 0.0
      %1242 = vmatpush1.msra.mxu0 0.0
      %1243 = vmatprep.subr.mxu0 0.0
      %1244 = vmatpush1.msra.mxu0 0.0
      %1245 = vmatprep.subr.mxu0 0.0
      %1246 = vmatpush1.msra.mxu0 0.0
      %1247 = vmatprep.subr.mxu0 0.0
      %1248 = vmatpush1.msra.mxu0 0.0
      %1249 = vmatprep.subr.mxu0 0.0
      %1250 = vmatpush1.msra.mxu0 0.0
      %1251 = vmatprep.subr.mxu0 0.0
      %1252 = vmatpush1.msra.mxu0 0.0
      %1253 = vmatprep.subr.mxu0 0.0
      %1254 = vmatpush1.msra.mxu0 0.0
      %1255 = vmatprep.subr.mxu0 0.0
      %1256 = vmatpush1.msra.mxu0 0.0
      %1257 = vmatprep.subr.mxu0 0.0
      %1258 = vmatpush1.msra.mxu0 0.0
      %1259 = vmatprep.subr.mxu0 0.0
      %1260 = vmatpush1.msra.mxu0 0.0
      %1261 = vmatprep.mubr.f32.mxu0 0.0
      %1262 = vmatmul.mubr.f32.gmra.mrb[0].mxu0 %v337
      %v1263 = vpop.f32.mrb[0].mxu0
      %v1264 = vadd.f32 0.0, %v1263
      %v1265 = vpop.f32.mrb[0].mxu0
      %1266 = vmatprep.mubr.f32.mxu0 0.0
      %1267 = vmatmul.mubr.f32.gmra.mrb[0].mxu0 %v339
      %v1268 = vpop.f32.mrb[0].mxu0
      %v1269 = vadd.f32 0.0, %v1268
      %v1270 = vpop.f32.mrb[0].mxu0
      %1271 = vmatprep.mubr.f32.mxu0 0.0
      %1272 = vmatmul.mubr.f32.gmra.mrb[0].mxu0 %v341
      %v1273 = vpop.f32.mrb[0].mxu0
      %v1274 = vadd.f32 0.0, %v1273
      %v1275 = vpop.f32.mrb[0].mxu0
      %1276 = vmatprep.mubr.f32.mxu0 0.0
      %1277 = vmatmul.mubr.f32.gmra.mrb[0].mxu0 %v343
      %v1278 = vpop.f32.mrb[0].mxu0
      %v1279 = vadd.f32 0.0, %v1278
      %v1280 = vpop.f32.mrb[0].mxu0
      %1281 = vmatprep.mubr.f32.mxu0 0.0
      %1282 = vmatmul.mubr.f32.gmra.mrb[0].mxu0 %v345
      %v1283 = vpop.f32.mrb[0].mxu0
      %v1284 = vadd.f32 0.0, %v1283
      %v1285 = vpop.f32.mrb[0].mxu0
      %1286 = vmatprep.mubr.f32.mxu0 0.0
      %1287 = vmatmul.mubr.f32.gmra.mrb[0].mxu0 %v347
      %v1288 = vpop.f32.mrb[0].mxu0
      %v1289 = vadd.f32 0.0, %v1288
      %v1290 = vpop.f32.mrb[0].mxu0
      %1291 = vmatprep.mubr.f32.mxu0 0.0
      %1292 = vmatmul.mubr.f32.gmra.mrb[0].mxu0 %v349
      %v1293 = vpop.f32.mrb[0].mxu0
      %v1294 = vadd.f32 0.0, %v1293
      %v1295 = vpop.f32.mrb[0].mxu0
      %1296 = vmatprep.mubr.f32.mxu0 0.0
      %1297 = vmatmul.mubr.f32.gmra.mrb[0].mxu0 %v351
      %v1298 = vpop.f32.mrb[0].mxu0
      %v1299 = vadd.f32 0.0, %v1298
      %v1300 = vpop.f32.mrb[0].mxu0
      %1301 = vmatprep.mubr.f32.mxu0 0.0
      %1302 = vmatmul.mubr.f32.gmra.mrb[0].mxu0 %v353
      %v1303 = vpop.f32.mrb[0].mxu0
      %v1304 = vadd.f32 0.0, %v1303
      %v1305 = vpop.f32.mrb[0].mxu0
      %1306 = vmatprep.mubr.f32.mxu0 0.0
      %1307 = vmatmul.mubr.f32.gmra.mrb[0].mxu0 %v355
      %v1308 = vpop.f32.mrb[0].mxu0
      %v1309 = vadd.f32 0.0, %v1308
      %v1310 = vpop.f32.mrb[0].mxu0
      %1311 = vmatprep.mubr.f32.mxu0 0.0
      %1312 = vmatmul.mubr.f32.gmra.mrb[0].mxu0 %v357
      %v1313 = vpop.f32.mrb[0].mxu0
      %v1314 = vadd.f32 0.0, %v1313
      %v1315 = vpop.f32.mrb[0].mxu0
      %1316 = vmatprep.mubr.f32.mxu0 0.0
      %1317 = vmatmul.mubr.f32.gmra.mrb[0].mxu0 %v359
      %v1318 = vpop.f32.mrb[0].mxu0
      %v1319 = vadd.f32 0.0, %v1318
      %v1320 = vpop.f32.mrb[0].mxu0
      %1321 = vmatprep.mubr.f32.mxu0 0.0
      %1322 = vmatmul.mubr.f32.gmra.mrb[0].mxu0 %v361
      %v1323 = vpop.f32.mrb[0].mxu0
      %v1324 = vadd.f32 0.0, %v1323
      %v1325 = vpop.f32.mrb[0].mxu0
      %1326 = vmatprep.mubr.f32.mxu0 0.0
      %1327 = vmatmul.mubr.f32.gmra.mrb[0].mxu0 %v363
      %v1328 = vpop.f32.mrb[0].mxu0
      %v1329 = vadd.f32 0.0, %v1328
      %v1330 = vpop.f32.mrb[0].mxu0
      %1331 = vmatprep.mubr.f32.mxu0 0.0
      %1332 = vmatmul.mubr.f32.gmra.mrb[0].mxu0 %v365
      %v1333 = vpop.f32.mrb[0].mxu0
      %v1334 = vadd.f32 0.0, %v1333
      %v1335 = vpop.f32.mrb[0].mxu0
      %1336 = vmatprep.mubr.f32.mxu0 0.0
      %1337 = vmatmul.mubr.f32.gmra.mrb[0].mxu0 %v367
      %v1338 = vpop.f32.mrb[0].mxu0
      %v1339 = vadd.f32 0.0, %v1338
      %v1340 = vpop.f32.mrb[0].mxu0
      %1341 = vmatprep.mubr.f32.mxu0 0.0
      %1342 = vmatmul.mubr.f32.gmra.mrb[0].mxu0 %v369
      %v1343 = vpop.f32.mrb[0].mxu0
      %v1344 = vadd.f32 0.0, %v1343
      %v1345 = vpop.f32.mrb[0].mxu0
      %1346 = vmatprep.mubr.f32.mxu0 0.0
      %1347 = vmatmul.mubr.f32.gmra.mrb[0].mxu0 %v371
      %v1348 = vpop.f32.mrb[0].mxu0
      %v1349 = vadd.f32 0.0, %v1348
      %v1350 = vpop.f32.mrb[0].mxu0
      %1351 = vmatprep.mubr.f32.mxu0 0.0
      %1352 = vmatmul.mubr.f32.gmra.mrb[0].mxu0 %v373
      %v1353 = vpop.f32.mrb[0].mxu0
      %v1354 = vadd.f32 0.0, %v1353
      %v1355 = vpop.f32.mrb[0].mxu0
      %1356 = vmatprep.mubr.f32.mxu0 0.0
      %1357 = vmatmul.mubr.f32.gmra.mrb[0].mxu0 %v375
      %v1358 = vpop.f32.mrb[0].mxu0
      %v1359 = vadd.f32 0.0, %v1358
      %v1360 = vpop.f32.mrb[0].mxu0
      %1361 = vmatprep.mubr.f32.mxu0 0.0
      %1362 = vmatmul.mubr.f32.gmra.mrb[0].mxu0 %v377
      %v1363 = vpop.f32.mrb[0].mxu0
      %v1364 = vadd.f32 0.0, %v1363
      %v1365 = vpop.f32.mrb[0].mxu0
      %1366 = vmatprep.mubr.f32.mxu0 0.0
      %1367 = vmatmul.mubr.f32.gmra.mrb[0].mxu0 %v379
      %v1368 = vpop.f32.mrb[0].mxu0
      %v1369 = vadd.f32 0.0, %v1368
      %v1370 = vpop.f32.mrb[0].mxu0
      %1371 = vmatprep.mubr.f32.mxu0 0.0
      %1372 = vmatmul.mubr.f32.gmra.mrb[0].mxu0 %v381
      %v1373 = vpop.f32.mrb[0].mxu0
      %v1374 = vadd.f32 0.0, %v1373
      %v1375 = vpop.f32.mrb[0].mxu0
      %1376 = vmatprep.mubr.f32.mxu0 0.0
      %1377 = vmatmul.mubr.f32.gmra.mrb[0].mxu0 %v383
      %v1378 = vpop.f32.mrb[0].mxu0
      %v1379 = vadd.f32 0.0, %v1378
      %v1380 = vpop.f32.mrb[0].mxu0
      %1381 = vmatprep.mubr.f32.mxu0 0.0
      %1382 = vmatmul.mubr.f32.gmra.mrb[0].mxu0 %v385
      %v1383 = vpop.f32.mrb[0].mxu0
      %v1384 = vadd.f32 0.0, %v1383
      %v1385 = vpop.f32.mrb[0].mxu0
      %1386 = vmatprep.mubr.f32.mxu0 0.0
      %1387 = vmatmul.mubr.f32.gmra.mrb[0].mxu0 %v387
      %v1388 = vpop.f32.mrb[0].mxu0
      %v1389 = vadd.f32 0.0, %v1388
      %v1390 = vpop.f32.mrb[0].mxu0
      %1391 = vmatprep.mubr.f32.mxu0 0.0
      %1392 = vmatmul.mubr.f32.gmra.mrb[0].mxu0 %v389
      %v1393 = vpop.f32.mrb[0].mxu0
      %v1394 = vadd.f32 0.0, %v1393
      %v1395 = vpop.f32.mrb[0].mxu0
      %1396 = vmatprep.mubr.f32.mxu0 0.0
      %1397 = vmatmul.mubr.f32.gmra.mrb[0].mxu0 %v391
      %v1398 = vpop.f32.mrb[0].mxu0
      %v1399 = vadd.f32 0.0, %v1398
      %v1400 = vpop.f32.mrb[0].mxu0
      %1401 = vmatprep.mubr.f32.mxu0 0.0
      %1402 = vmatmul.mubr.f32.gmra.mrb[0].mxu0 %v393
      %v1403 = vpop.f32.mrb[0].mxu0
      %v1404 = vadd.f32 0.0, %v1403
      %v1405 = vpop.f32.mrb[0].mxu0
      %1406 = vmatprep.mubr.f32.mxu0 0.0
      %1407 = vmatmul.mubr.f32.gmra.mrb[0].mxu0 %v395
      %v1408 = vpop.f32.mrb[0].mxu0
      %v1409 = vadd.f32 0.0, %v1408
      %v1410 = vpop.f32.mrb[0].mxu0
      %1411 = vmatprep.mubr.f32.mxu0 0.0
      %1412 = vmatmul.mubr.f32.gmra.mrb[0].mxu0 %v1190
      %v1413 = vpop.f32.mrb[0].mxu0
      %v1414 = vadd.f32 0.0, %v1413
      %v1415 = vpop.f32.mrb[0].mxu0
      %1416 = vmatprep.mubr.f32.mxu0 0.0
      %1417 = vmatmul.mubr.f32.gmra.mrb[0].mxu0 %v1192
      %v1418 = vpop.f32.mrb[0].mxu0
      %v1419 = vadd.f32 0.0, %v1418
      %v1420 = vpop.f32.mrb[0].mxu0
      %1421 = vdwg.mxu0
      %v1422 = vadd.f32 %v1152, %v1264
      %v1423 = vadd.f32 %v1153, %v1269
      %v1424 = vadd.f32 %v1154, %v1274
      %v1425 = vadd.f32 %v1155, %v1279
      %v1426 = vadd.f32 %v1156, %v1284
      %v1427 = vadd.f32 %v1157, %v1289
      %v1428 = vadd.f32 %v1158, %v1294
      %v1429 = vadd.f32 %v1159, %v1299
      %v1430 = vadd.f32 %v1160, %v1304
      %v1431 = vadd.f32 %v1161, %v1309
      %v1432 = vadd.f32 %v1162, %v1314
      %v1433 = vadd.f32 %v1163, %v1319
      %v1434 = vadd.f32 %v1164, %v1324
      %v1435 = vadd.f32 %v1165, %v1329
      %v1436 = vadd.f32 %v1166, %v1334
      %v1437 = vadd.f32 %v1167, %v1339
      %v1438 = vadd.f32 %v1168, %v1344
      %v1439 = vadd.f32 %v1169, %v1349
      %v1440 = vadd.f32 %v1170, %v1354
      %v1441 = vadd.f32 %v1171, %v1359
      %v1442 = vadd.f32 %v1172, %v1364
      %v1443 = vadd.f32 %v1173, %v1369
      %v1444 = vadd.f32 %v1174, %v1374
      %v1445 = vadd.f32 %v1175, %v1379
      %v1446 = vadd.f32 %v1176, %v1384
      %v1447 = vadd.f32 %v1177, %v1389
      %v1448 = vadd.f32 %v1178, %v1394
      %v1449 = vadd.f32 %v1179, %v1399
      %v1450 = vadd.f32 %v1180, %v1404
      %v1451 = vadd.f32 %v1181, %v1409
      %v1452 = vadd.f32 %v1182, %v1414
      %v1453 = vadd.f32 %v1183, %v1419
      %v1454 = vmax.f32 %v1422, 0.0
      %v1455 = vmax.f32 %v1423, 0.0
      %v1456 = vmax.f32 %v1424, 0.0
      %v1457 = vmax.f32 %v1425, 0.0
      %v1458 = vmax.f32 %v1426, 0.0
      %v1459 = vmax.f32 %v1427, 0.0
      %v1460 = vmax.f32 %v1428, 0.0
      %v1461 = vmax.f32 %v1429, 0.0
      %v1462 = vmax.f32 %v1430, 0.0
      %v1463 = vmax.f32 %v1431, 0.0
      %v1464 = vmax.f32 %v1432, 0.0
      %v1465 = vmax.f32 %v1433, 0.0
      %v1466 = vmax.f32 %v1434, 0.0
      %v1467 = vmax.f32 %v1435, 0.0
      %v1468 = vmax.f32 %v1436, 0.0
      %v1469 = vmax.f32 %v1437, 0.0
      %v1470 = vmax.f32 %v1438, 0.0
      %v1471 = vmax.f32 %v1439, 0.0
      %v1472 = vmax.f32 %v1440, 0.0
      %v1473 = vmax.f32 %v1441, 0.0
      %v1474 = vmax.f32 %v1442, 0.0
      %v1475 = vmax.f32 %v1443, 0.0
      %v1476 = vmax.f32 %v1444, 0.0
      %v1477 = vmax.f32 %v1445, 0.0
      %v1478 = vmax.f32 %v1446, 0.0
      %v1479 = vmax.f32 %v1447, 0.0
      %v1480 = vmax.f32 %v1448, 0.0
      %v1481 = vmax.f32 %v1449, 0.0
      %v1482 = vmax.f32 %v1450, 0.0
      %v1483 = vmax.f32 %v1451, 0.0
      %v1484 = vmax.f32 %v1452, 0.0
      %v1485 = vmax.f32 %v1453, 0.0
      %vm1486 = vcmask 31744
      %1487 = vst.msk [vmem:[%s143] sm:$0xff] %vm1486, %v1454
      %1488 = vst.msk [vmem:[%s143 + $0x8] sm:$0xff] %vm1486, %v1455
      %1489 = vst.msk [vmem:[%s143 + $0x10] sm:$0xff] %vm1486, %v1456
      %1490 = vst.msk [vmem:[%s143 + $0x18] sm:$0xff] %vm1486, %v1457
      %1491 = vst.msk [vmem:[%s143 + $0x20] sm:$0xff] %vm1486, %v1458
      %1492 = vst.msk [vmem:[%s143 + $0x28] sm:$0xff] %vm1486, %v1459
      %1493 = vst.msk [vmem:[%s143 + $0x30] sm:$0xff] %vm1486, %v1460
      %1494 = vst.msk [vmem:[%s143 + $0x38] sm:$0xff] %vm1486, %v1461
      %1495 = vst.msk [vmem:[%s143 + $0x40] sm:$0xff] %vm1486, %v1462
      %1496 = vst.msk [vmem:[%s143 + $0x48] sm:$0xff] %vm1486, %v1463
      %1497 = vst.msk [vmem:[%s143 + $0x50] sm:$0xff] %vm1486, %v1464
      %1498 = vst.msk [vmem:[%s143 + $0x58] sm:$0xff] %vm1486, %v1465
      %1499 = vst.msk [vmem:[%s143 + $0x60] sm:$0xff] %vm1486, %v1466
      %1500 = vst.msk [vmem:[%s143 + $0x68] sm:$0xff] %vm1486, %v1467
      %1501 = vst.msk [vmem:[%s143 + $0x70] sm:$0xff] %vm1486, %v1468
      %1502 = vst.msk [vmem:[%s143 + $0x78] sm:$0xff] %vm1486, %v1469
      %1503 = vst.msk [vmem:[%s143 + $0x80] sm:$0xff] %vm1486, %v1470
      %1504 = vst.msk [vmem:[%s143 + $0x88] sm:$0xff] %vm1486, %v1471
      %1505 = vst.msk [vmem:[%s143 + $0x90] sm:$0xff] %vm1486, %v1472
      %1506 = vst.msk [vmem:[%s143 + $0x98] sm:$0xff] %vm1486, %v1473
      %1507 = vst.msk [vmem:[%s143 + $0xa0] sm:$0xff] %vm1486, %v1474
      %1508 = vst.msk [vmem:[%s143 + $0xa8] sm:$0xff] %vm1486, %v1475
      %1509 = vst.msk [vmem:[%s143 + $0xb0] sm:$0xff] %vm1486, %v1476
      %1510 = vst.msk [vmem:[%s143 + $0xb8] sm:$0xff] %vm1486, %v1477
      %1511 = vst.msk [vmem:[%s143 + $0xc0] sm:$0xff] %vm1486, %v1478
      %1512 = vst.msk [vmem:[%s143 + $0xc8] sm:$0xff] %vm1486, %v1479
      %1513 = vst.msk [vmem:[%s143 + $0xd0] sm:$0xff] %vm1486, %v1480
      %1514 = vst.msk [vmem:[%s143 + $0xd8] sm:$0xff] %vm1486, %v1481
      %1515 = vst.msk [vmem:[%s143 + $0xe0] sm:$0xff] %vm1486, %v1482
      %1516 = vst.msk [vmem:[%s143 + $0xe8] sm:$0xff] %vm1486, %v1483
      %1517 = vst.msk [vmem:[%s143 + $0xf0] sm:$0xff] %vm1486, %v1484
      %1518 = vst.msk [vmem:[%s143 + $0xf8] sm:$0xff] %vm1486, %v1485
      %p1519 = scmp.lt.s32.totalorder %s13, 1
      %s1520 = scalar_select %p1519, %s13, 1
      %s1521 = smul.addr %s1520, 32
      %s1522 = smul.addr %s1521, 8
      %s1523 = scalar_lea.vmem %s2, %s1522
      // Predicated region
      $region29: #{tpu_custom_call.1} parent=27 // pred_check
        %p1524 = pneg %p78
      $region30: #{tpu_custom_call.1} parent=27 // pred_check_branch
        %1526 = sbr.rel (%p1524) target = $region32
      $region31: #{tpu_custom_call.1} parent=27 // pred_region
        _
      $region32: #{tpu_custom_call.1} parent=27 // pred_fallthru
        _
    $region28: #{tpu_custom_call.1} parent=5 // pred_fallthru
      _
    %p1527 = scmp.le.s32.totalorder 2, %s8
    // Predicated region
    $region33: #{tpu_custom_call.1} parent=5 // pred_check
      %p1528 = pneg %p1527
    $region34: #{tpu_custom_call.1} parent=5 // pred_check_branch
      %1530 = sbr.rel (%p1528) target = $region36
    $region35: #{tpu_custom_call.1} parent=5 // pred_region
      %s1531 = ssub.s32 %s8, 2
      // Predicated region
      $region37: #{tpu_custom_call.1} parent=35 // pred_check
        %p1532 = pneg %p84
      $region38: #{tpu_custom_call.1} parent=35 // pred_check_branch
        %1534 = sbr.rel (%p1532) target = $region40
      $region39: #{tpu_custom_call.1} parent=35 // pred_region
        %p1535 = scmp.lt.s32.totalorder %s14, 1
        %s1536 = scalar_select %p1535, %s14, 1
        %s1537 = smul.addr %s1536, 32
        %s1538 = smul.addr %s1537, 8
        %s1539 = scalar_lea.vmem %s2, %s1538
      $region40: #{tpu_custom_call.1} parent=35 // pred_fallthru
        _
    $region36: #{tpu_custom_call.1} parent=5 // pred_fallthru
      _
  $region6: #{tpu_custom_call.1} parent=0 // loop_footer
    %s12 = sadd.s32 1, %s8
  $region7: #{tpu_custom_call.1} parent=0 // loop_footer_branch
    %7 = sbr.rel target = $region3
  $region8: #{tpu_custom_call.1} parent=0 // loop_exit
    _

</llo_original>
